<compile_context>
chip_gen: v6e
topology: v6e:2x2x1
jax: 0.10.0
libtpu: 0.0.40
codegen_flags: <defaults>
</compile_context>

<pallas_src>
import functools

import jax
import jax.numpy as jnp
from jax.experimental import pallas as pl
from jax.experimental.pallas import tpu as pltpu


def _global_ssl_kernel(u_idx_ref, i_idx_ref,            # (bu,1)/(bi,1) int32, VMEM
                       u1_ref, u2_ref, i1_ref, i2_ref,  # full embedding tables, VMEM
                       loss_ref,                        # (1,) f32 in SMEM
                       *, temperature, bu, bi, padded_rows):
    f32 = jnp.float32
    sqrt_inv_t = f32(float(temperature) ** -0.5)

    # ---- in-VMEM gather via one-hot matmul on the (otherwise idle) MXU ----
    def gather(idx, table):                      # idx (b,1) int32, table (n,d)
        b = idx.shape[0]
        n = table.shape[0]
        cols = jax.lax.broadcasted_iota(jnp.int32, (b, n), 1)
        onehot = (cols == idx).astype(f32)
        return jax.lax.dot_general(onehot, table.astype(f32),
                                   (((1,), (0,)), ((), ())),
                                   preferred_element_type=f32)

    u1 = gather(u_idx_ref[...], u1_ref[...])
    u2 = gather(u_idx_ref[...], u2_ref[...])
    i1 = gather(i_idx_ref[...], i1_ref[...])
    i2 = gather(i_idx_ref[...], i2_ref[...])

    # ---- user views are L2-normalized (items are not); fold 1/T into views ----
    def l2norm(v):
        # F.normalize(dim=1): v / max(||v||, 1e-12) == v * rsqrt(max(||v||^2, 1e-24))
        ss = jnp.sum(v * v, axis=1, keepdims=True)
        return v * jax.lax.rsqrt(jnp.maximum(ss, f32(1e-24)))

    u1 = l2norm(u1) * sqrt_inv_t
    u2 = l2norm(u2) * sqrt_inv_t
    i1 = i1 * sqrt_inv_t
    i2 = i2 * sqrt_inv_t

    d = u1.shape[1]
    nrows = 2 * bu + 2 * bi
    pad = padded_rows - nrows
    parts = [u1, u2, i1, i2]
    if pad > 0:
        parts.append(jnp.zeros((pad, d), f32))
    v = jnp.concatenate(parts, axis=0)                           # (P, d)

    # ---- ONE fused, lane-dense similarity matmul (already scaled by 1/T) ----
    # Quadrants of S are exactly sim11 / sim12 / sim21 / sim22 for both losses.
    sims = jax.lax.dot_general(v, v, (((1,), (1,)), ((), ())),
                               preferred_element_type=f32)       # (P, P)

    p = padded_rows
    r2 = jax.lax.broadcasted_iota(jnp.int32, (p, p), 0)
    c2 = jax.lax.broadcasted_iota(jnp.int32, (p, p), 1)
    user_rows = r2 < 2 * bu
    item_rows = (r2 >= 2 * bu) & (r2 < nrows)
    user_cols = c2 < 2 * bu
    item_cols = (c2 >= 2 * bu) & (c2 < nrows)
    # valid logit positions: stay within own block (user/item) and off-diagonal
    valid = ((user_rows & user_cols) | (item_rows & item_cols)) & (r2 != c2)

    # Large finite negative (not -inf): padded rows have no valid columns and
    # -inf there would produce exp(-inf - (-inf)) = NaN; -1e30 underflows to 0
    # identically to -inf for every real row (its target column is never masked).
    neg_big = f32(-1e30)
    sims_m = jnp.where(valid, sims, neg_big)

    # target logit of row r is S[r, partner(r)]  (== diag(sim12) for its group)
    rr = jax.lax.broadcasted_iota(jnp.int32, (p, 1), 0)
    partner = jnp.where(rr < bu, rr + bu,
              jnp.where(rr < 2 * bu, rr - bu,
              jnp.where(rr < 2 * bu + bi, rr + bi,
              jnp.where(rr < nrows, rr - bi, rr))))
    tgt = jnp.sum(jnp.where(c2 == partner, sims, f32(0.0)),
                  axis=1, keepdims=True)                          # (P, 1)

    # row-wise logsumexp over the masked similarities
    m = jnp.max(sims_m, axis=1, keepdims=True)
    lse = jnp.log(jnp.sum(jnp.exp(sims_m - m), axis=1, keepdims=True)) + m

    # CrossEntropyLoss mean reduction per group; padded rows get zero weight.
    w = jnp.where(rr < 2 * bu, f32(1.0 / (2 * bu)),
        jnp.where(rr < nrows, f32(1.0 / (2 * bi)), f32(0.0)))

    total = jnp.sum(w * (lse - tgt), keepdims=True)               # (1, 1)
    loss_ref[0] = total[0, 0]


def global_ssl_forward(input_u_list, input_i_list,
                       u_sub1_embeddings, i_sub1_embeddings,
                       u_sub2_embeddings, i_sub2_embeddings,
                       *, embed_size, temperature):
    # Only the reshape glue stays in plain JAX (a no-op for 2-D inputs).
    u1 = u_sub1_embeddings.reshape(-1, embed_size)
    u2 = u_sub2_embeddings.reshape(-1, embed_size)
    i1 = i_sub1_embeddings.reshape(-1, embed_size)
    i2 = i_sub2_embeddings.reshape(-1, embed_size)

    bu = int(input_u_list.shape[0])
    bi = int(input_i_list.shape[0])
    d = int(embed_size)
    nu = int(u1.shape[0])
    ni = int(i1.shape[0])

    nrows = 2 * (bu + bi)
    padded_rows = max(128, ((nrows + 127) // 128) * 128)   # lane-dense sims

    kern = functools.partial(_global_ssl_kernel,
                             temperature=float(temperature),
                             bu=bu, bi=bi, padded_rows=padded_rows)

    grid_spec = pltpu.PrefetchScalarGridSpec(
        num_scalar_prefetch=0,
        grid=(1,),
        in_specs=[
            pl.BlockSpec((bu, 1), lambda i: (0, 0)),   # user indices
            pl.BlockSpec((bi, 1), lambda i: (0, 0)),   # item indices
            pl.BlockSpec((nu, d), lambda i: (0, 0)),   # u1 table (full block)
            pl.BlockSpec((nu, d), lambda i: (0, 0)),   # u2 table
            pl.BlockSpec((ni, d), lambda i: (0, 0)),   # i1 table
            pl.BlockSpec((ni, d), lambda i: (0, 0)),   # i2 table
        ],
        out_specs=pl.BlockSpec(memory_space=pltpu.MemorySpace.SMEM),
    )

    out = pl.pallas_call(
        kern,
        grid_spec=grid_spec,
        out_shape=jax.ShapeDtypeStruct((1,), jnp.float32),
        compiler_params=pltpu.CompilerParams(
            dimension_semantics=("arbitrary",)),
    )(input_u_list.astype(jnp.int32).reshape(bu, 1),
      input_i_list.astype(jnp.int32).reshape(bi, 1),
      u1, u2, i1, i2)
    return out[0]


# ----------------------------- pure-JAX reference -----------------------------
def _reference(input_u_list, input_i_list, u1, i1, u2, i2, embed_size, temperature):
    def one(v1, v2, normalize):
        if normalize:
            v1 = v1 / jnp.maximum(jnp.linalg.norm(v1, axis=1, keepdims=True), 1e-12)
            v2 = v2 / jnp.maximum(jnp.linalg.norm(v2, axis=1, keepdims=True), 1e-12)
        s11 = v1 @ v1.T
        s22 = v2 @ v2.T
        s12 = v1 @ v2.T
        B = v1.shape[0]
        eye = jnp.eye(B, dtype=bool)
        s11 = jnp.where(eye, -jnp.inf, s11)
        s22 = jnp.where(eye, -jnp.inf, s22)
        logits = jnp.concatenate(
            [jnp.concatenate([s12, s11], -1),
             jnp.concatenate([s22, s12.T], -1)], 0) / temperature
        tgt = jnp.arange(2 * B)
        lse = jax.scipy.special.logsumexp(logits, axis=1)
        return jnp.mean(lse - logits[jnp.arange(2 * B), tgt])

    u1 = u1.reshape(-1, embed_size); u2 = u2.reshape(-1, embed_size)
    i1 = i1.reshape(-1, embed_size); i2 = i2.reshape(-1, embed_size)
    return (one(u1[input_u_list], u2[input_u_list], True) +
            one(i1[input_i_list], i2[input_i_list], False))


if __name__ == "__main__":
    EMBED_SIZE = 32
    TEMPERATURE = 0.2
    N_USERS, N_ITEMS = 64, 64
    BATCH = 16

    key = jax.random.PRNGKey(0)
    k1, k2, k3, k4, k5, k6 = jax.random.split(key, 6)

    # Deterministic synthetic "embedding" inputs (module has no trainable params).
    u_sub1 = jax.random.normal(k1, (N_USERS, EMBED_SIZE), jnp.float32) * 0.1
    u_sub2 = jax.random.normal(k2, (N_USERS, EMBED_SIZE), jnp.float32) * 0.1
    i_sub1 = jax.random.normal(k3, (N_ITEMS, EMBED_SIZE), jnp.float32) * 0.1
    i_sub2 = jax.random.normal(k4, (N_ITEMS, EMBED_SIZE), jnp.float32) * 0.1
    input_u_list = jax.random.randint(k5, (BATCH,), 0, N_USERS, jnp.int32)
    input_i_list = jax.random.randint(k6, (BATCH,), 0, N_ITEMS, jnp.int32)

    fwd = jax.jit(functools.partial(global_ssl_forward,
                                    embed_size=EMBED_SIZE,
                                    temperature=TEMPERATURE))
    loss = fwd(input_u_list, input_i_list, u_sub1, i_sub1, u_sub2, i_sub2)
    loss = jax.block_until_ready(loss)

    ref = _reference(input_u_list, input_i_list,
                     u_sub1, i_sub1, u_sub2, i_sub2,
                     EMBED_SIZE, TEMPERATURE)
    assert jnp.isfinite(loss), "loss is not finite"
    assert jnp.allclose(loss, ref, rtol=1e-2, atol=1e-2), (loss, ref)

    print("KERNEL_OK")
</pallas_src>

<mosaic_0001>
module attributes {stable_mosaic.version = 11 : i64} {
  func.func @_global_ssl_kernel(%arg0: i32, %arg1: memref<16x1xi32, #tpu.memory_space<vmem>>, %arg2: memref<16x1xi32, #tpu.memory_space<vmem>>, %arg3: memref<64x32xf32, #tpu.memory_space<vmem>>, %arg4: memref<64x32xf32, #tpu.memory_space<vmem>>, %arg5: memref<64x32xf32, #tpu.memory_space<vmem>>, %arg6: memref<64x32xf32, #tpu.memory_space<vmem>>, %arg7: memref<1xf32, #tpu.memory_space<smem>>) attributes {dimension_semantics = [#tpu.dimension_semantics<arbitrary>], iteration_bounds = array<i64: 1>, scalar_prefetch = 0 : i64, scratch_operands = 0 : i64, tpu.core_type = #tpu.core_type<tc>, window_params = [{pipeline_mode = #tpu.pipeline_mode<synchronous>, transform_indices = @transform_0, window_bounds = array<i64: 16, 1>}, {pipeline_mode = #tpu.pipeline_mode<synchronous>, transform_indices = @transform_1, window_bounds = array<i64: 16, 1>}, {pipeline_mode = #tpu.pipeline_mode<synchronous>, transform_indices = @transform_2, window_bounds = array<i64: 64, 32>}, {pipeline_mode = #tpu.pipeline_mode<synchronous>, transform_indices = @transform_3, window_bounds = array<i64: 64, 32>}, {pipeline_mode = #tpu.pipeline_mode<synchronous>, transform_indices = @transform_4, window_bounds = array<i64: 64, 32>}, {pipeline_mode = #tpu.pipeline_mode<synchronous>, transform_indices = @transform_5, window_bounds = array<i64: 64, 32>}, {transform_indices = @transform_6, window_bounds = array<i64: 1>}]} {
    %c0 = arith.constant 0 : index
    %c0_0 = arith.constant 0 : index
    %0 = vector.load %arg1[%c0, %c0_0] : memref<16x1xi32, #tpu.memory_space<vmem>>, vector<16x1xi32>
    %c0_1 = arith.constant 0 : index
    %c0_2 = arith.constant 0 : index
    %1 = vector.load %arg3[%c0_1, %c0_2] : memref<64x32xf32, #tpu.memory_space<vmem>>, vector<64x32xf32>
    %2 = tpu.iota {dimensions = array<i32: 1>} : vector<16x64xi32>
    %3 = vector.broadcast %0 : vector<16x1xi32> to vector<16x64xi32>
    %4 = arith.cmpi eq, %2, %3 : vector<16x64xi32>
    %5 = arith.extui %4 : vector<16x64xi1> to vector<16x64xi32>
    %6 = arith.sitofp %5 : vector<16x64xi32> to vector<16x64xf32>
    %cst = arith.constant dense<0.000000e+00> : vector<16x32xf32>
    %7 = tpu.matmul %6, %1, %cst {dimension_numbers = #tpu.dot_dimension_numbers<[1], [0], [0], [1], [0, 0, 1, 1], [], []>} : vector<16x64xf32>, vector<64x32xf32>, vector<16x32xf32> -> vector<16x32xf32>
    %c0_3 = arith.constant 0 : index
    %c0_4 = arith.constant 0 : index
    %8 = vector.load %arg1[%c0_3, %c0_4] : memref<16x1xi32, #tpu.memory_space<vmem>>, vector<16x1xi32>
    %c0_5 = arith.constant 0 : index
    %c0_6 = arith.constant 0 : index
    %9 = vector.load %arg4[%c0_5, %c0_6] : memref<64x32xf32, #tpu.memory_space<vmem>>, vector<64x32xf32>
    %10 = tpu.iota {dimensions = array<i32: 1>} : vector<16x64xi32>
    %11 = vector.broadcast %8 : vector<16x1xi32> to vector<16x64xi32>
    %12 = arith.cmpi eq, %10, %11 : vector<16x64xi32>
    %13 = arith.extui %12 : vector<16x64xi1> to vector<16x64xi32>
    %14 = arith.sitofp %13 : vector<16x64xi32> to vector<16x64xf32>
    %cst_7 = arith.constant dense<0.000000e+00> : vector<16x32xf32>
    %15 = tpu.matmul %14, %9, %cst_7 {dimension_numbers = #tpu.dot_dimension_numbers<[1], [0], [0], [1], [0, 0, 1, 1], [], []>} : vector<16x64xf32>, vector<64x32xf32>, vector<16x32xf32> -> vector<16x32xf32>
    %c0_8 = arith.constant 0 : index
    %c0_9 = arith.constant 0 : index
    %16 = vector.load %arg2[%c0_8, %c0_9] : memref<16x1xi32, #tpu.memory_space<vmem>>, vector<16x1xi32>
    %c0_10 = arith.constant 0 : index
    %c0_11 = arith.constant 0 : index
    %17 = vector.load %arg5[%c0_10, %c0_11] : memref<64x32xf32, #tpu.memory_space<vmem>>, vector<64x32xf32>
    %18 = tpu.iota {dimensions = array<i32: 1>} : vector<16x64xi32>
    %19 = vector.broadcast %16 : vector<16x1xi32> to vector<16x64xi32>
    %20 = arith.cmpi eq, %18, %19 : vector<16x64xi32>
    %21 = arith.extui %20 : vector<16x64xi1> to vector<16x64xi32>
    %22 = arith.sitofp %21 : vector<16x64xi32> to vector<16x64xf32>
    %cst_12 = arith.constant dense<0.000000e+00> : vector<16x32xf32>
    %23 = tpu.matmul %22, %17, %cst_12 {dimension_numbers = #tpu.dot_dimension_numbers<[1], [0], [0], [1], [0, 0, 1, 1], [], []>} : vector<16x64xf32>, vector<64x32xf32>, vector<16x32xf32> -> vector<16x32xf32>
    %c0_13 = arith.constant 0 : index
    %c0_14 = arith.constant 0 : index
    %24 = vector.load %arg2[%c0_13, %c0_14] : memref<16x1xi32, #tpu.memory_space<vmem>>, vector<16x1xi32>
    %c0_15 = arith.constant 0 : index
    %c0_16 = arith.constant 0 : index
    %25 = vector.load %arg6[%c0_15, %c0_16] : memref<64x32xf32, #tpu.memory_space<vmem>>, vector<64x32xf32>
    %26 = tpu.iota {dimensions = array<i32: 1>} : vector<16x64xi32>
    %27 = vector.broadcast %24 : vector<16x1xi32> to vector<16x64xi32>
    %28 = arith.cmpi eq, %26, %27 : vector<16x64xi32>
    %29 = arith.extui %28 : vector<16x64xi1> to vector<16x64xi32>
    %30 = arith.sitofp %29 : vector<16x64xi32> to vector<16x64xf32>
    %cst_17 = arith.constant dense<0.000000e+00> : vector<16x32xf32>
    %31 = tpu.matmul %30, %25, %cst_17 {dimension_numbers = #tpu.dot_dimension_numbers<[1], [0], [0], [1], [0, 0, 1, 1], [], []>} : vector<16x64xf32>, vector<64x32xf32>, vector<16x32xf32> -> vector<16x32xf32>
    %32 = arith.mulf %7, %7 : vector<16x32xf32>
    %cst_18 = arith.constant dense<0.000000e+00> : vector<16xf32>
    %33 = vector.multi_reduction <add>, %32, %cst_18 [1] : vector<16x32xf32> to vector<16xf32>
    %34 = vector.shape_cast %33 : vector<16xf32> to vector<16x1xf32>
    %cst_19 = arith.constant 1.000000e-24 : f32
    %35 = vector.broadcast %cst_19 : f32 to vector<16x1xf32>
    %36 = arith.maximumf %34, %35 : vector<16x1xf32>
    %37 = math.rsqrt %36 : vector<16x1xf32>
    %38 = vector.broadcast %37 : vector<16x1xf32> to vector<16x32xf32>
    %39 = arith.mulf %7, %38 : vector<16x32xf32>
    %cst_20 = arith.constant 2.23606801 : f32
    %40 = vector.broadcast %cst_20 : f32 to vector<16x32xf32>
    %41 = arith.mulf %39, %40 : vector<16x32xf32>
    %42 = arith.mulf %15, %15 : vector<16x32xf32>
    %cst_21 = arith.constant dense<0.000000e+00> : vector<16xf32>
    %43 = vector.multi_reduction <add>, %42, %cst_21 [1] : vector<16x32xf32> to vector<16xf32>
    %44 = vector.shape_cast %43 : vector<16xf32> to vector<16x1xf32>
    %cst_22 = arith.constant 1.000000e-24 : f32
    %45 = vector.broadcast %cst_22 : f32 to vector<16x1xf32>
    %46 = arith.maximumf %44, %45 : vector<16x1xf32>
    %47 = math.rsqrt %46 : vector<16x1xf32>
    %48 = vector.broadcast %47 : vector<16x1xf32> to vector<16x32xf32>
    %49 = arith.mulf %15, %48 : vector<16x32xf32>
    %cst_23 = arith.constant 2.23606801 : f32
    %50 = vector.broadcast %cst_23 : f32 to vector<16x32xf32>
    %51 = arith.mulf %49, %50 : vector<16x32xf32>
    %cst_24 = arith.constant 2.23606801 : f32
    %52 = vector.broadcast %cst_24 : f32 to vector<16x32xf32>
    %53 = arith.mulf %23, %52 : vector<16x32xf32>
    %cst_25 = arith.constant 2.23606801 : f32
    %54 = vector.broadcast %cst_25 : f32 to vector<16x32xf32>
    %55 = arith.mulf %31, %54 : vector<16x32xf32>
    %cst_26 = arith.constant 0.000000e+00 : f32
    %56 = vector.broadcast %cst_26 : f32 to vector<64x32xf32>
    %57 = tpu.concatenate %41, %51, %53, %55, %56 in 0 : vector<16x32xf32>, vector<16x32xf32>, vector<16x32xf32>, vector<16x32xf32>, vector<64x32xf32> -> vector<128x32xf32>
    %cst_27 = arith.constant dense<0.000000e+00> : vector<128x128xf32>
    %58 = tpu.matmul %57, %57, %cst_27 {dimension_numbers = #tpu.dot_dimension_numbers<[1], [1], [0], [0], [0, 0, 1, 0], [], []>} : vector<128x32xf32>, vector<128x32xf32>, vector<128x128xf32> -> vector<128x128xf32>
    %59 = tpu.iota {dimensions = array<i32: 0>} : vector<128x128xi32>
    %60 = tpu.iota {dimensions = array<i32: 1>} : vector<128x128xi32>
    %c32_i32 = arith.constant 32 : i32
    %61 = vector.broadcast %c32_i32 : i32 to vector<128x128xi32>
    %62 = arith.cmpi slt, %59, %61 : vector<128x128xi32>
    %c32_i32_28 = arith.constant 32 : i32
    %63 = vector.broadcast %c32_i32_28 : i32 to vector<128x128xi32>
    %64 = arith.cmpi sge, %59, %63 : vector<128x128xi32>
    %c64_i32 = arith.constant 64 : i32
    %65 = vector.broadcast %c64_i32 : i32 to vector<128x128xi32>
    %66 = arith.cmpi slt, %59, %65 : vector<128x128xi32>
    %67 = arith.andi %64, %66 : vector<128x128xi1>
    %c32_i32_29 = arith.constant 32 : i32
    %68 = vector.broadcast %c32_i32_29 : i32 to vector<128x128xi32>
    %69 = arith.cmpi slt, %60, %68 : vector<128x128xi32>
    %c32_i32_30 = arith.constant 32 : i32
    %70 = vector.broadcast %c32_i32_30 : i32 to vector<128x128xi32>
    %71 = arith.cmpi sge, %60, %70 : vector<128x128xi32>
    %c64_i32_31 = arith.constant 64 : i32
    %72 = vector.broadcast %c64_i32_31 : i32 to vector<128x128xi32>
    %73 = arith.cmpi slt, %60, %72 : vector<128x128xi32>
    %74 = arith.andi %71, %73 : vector<128x128xi1>
    %75 = arith.andi %62, %69 : vector<128x128xi1>
    %76 = arith.andi %67, %74 : vector<128x128xi1>
    %77 = arith.ori %75, %76 : vector<128x128xi1>
    %78 = arith.cmpi ne, %59, %60 : vector<128x128xi32>
    %79 = arith.andi %77, %78 : vector<128x128xi1>
    %cst_32 = arith.constant -1.000000e+30 : f32
    %80 = vector.broadcast %cst_32 : f32 to vector<128x128xf32>
    %81 = arith.select %79, %58, %80 : vector<128x128xi1>, vector<128x128xf32>
    %82 = tpu.iota {dimensions = array<i32: 0>} : vector<128x1xi32>
    %c16_i32 = arith.constant 16 : i32
    %83 = vector.broadcast %c16_i32 : i32 to vector<128x1xi32>
    %84 = arith.cmpi slt, %82, %83 : vector<128x1xi32>
    %c16_i32_33 = arith.constant 16 : i32
    %85 = vector.broadcast %c16_i32_33 : i32 to vector<128x1xi32>
    %86 = arith.addi %82, %85 : vector<128x1xi32>
    %c32_i32_34 = arith.constant 32 : i32
    %87 = vector.broadcast %c32_i32_34 : i32 to vector<128x1xi32>
    %88 = arith.cmpi slt, %82, %87 : vector<128x1xi32>
    %c16_i32_35 = arith.constant 16 : i32
    %89 = vector.broadcast %c16_i32_35 : i32 to vector<128x1xi32>
    %90 = arith.subi %82, %89 : vector<128x1xi32>
    %c48_i32 = arith.constant 48 : i32
    %91 = vector.broadcast %c48_i32 : i32 to vector<128x1xi32>
    %92 = arith.cmpi slt, %82, %91 : vector<128x1xi32>
    %c16_i32_36 = arith.constant 16 : i32
    %93 = vector.broadcast %c16_i32_36 : i32 to vector<128x1xi32>
    %94 = arith.addi %82, %93 : vector<128x1xi32>
    %c64_i32_37 = arith.constant 64 : i32
    %95 = vector.broadcast %c64_i32_37 : i32 to vector<128x1xi32>
    %96 = arith.cmpi slt, %82, %95 : vector<128x1xi32>
    %c16_i32_38 = arith.constant 16 : i32
    %97 = vector.broadcast %c16_i32_38 : i32 to vector<128x1xi32>
    %98 = arith.subi %82, %97 : vector<128x1xi32>
    %99 = arith.select %96, %98, %82 : vector<128x1xi1>, vector<128x1xi32>
    %100 = arith.select %92, %94, %99 : vector<128x1xi1>, vector<128x1xi32>
    %101 = arith.select %88, %90, %100 : vector<128x1xi1>, vector<128x1xi32>
    %102 = arith.select %84, %86, %101 : vector<128x1xi1>, vector<128x1xi32>
    %103 = vector.broadcast %102 : vector<128x1xi32> to vector<128x128xi32>
    %104 = arith.cmpi eq, %60, %103 : vector<128x128xi32>
    %cst_39 = arith.constant 0.000000e+00 : f32
    %105 = vector.broadcast %cst_39 : f32 to vector<128x128xf32>
    %106 = arith.select %104, %58, %105 : vector<128x128xi1>, vector<128x128xf32>
    %cst_40 = arith.constant dense<0.000000e+00> : vector<128xf32>
    %107 = vector.multi_reduction <add>, %106, %cst_40 [1] : vector<128x128xf32> to vector<128xf32>
    %108 = vector.shape_cast %107 : vector<128xf32> to vector<128x1xf32>
    %cst_41 = arith.constant dense<0xFF800000> : vector<128xf32>
    %109 = vector.multi_reduction <maximumf>, %81, %cst_41 [1] : vector<128x128xf32> to vector<128xf32>
    %110 = vector.shape_cast %109 : vector<128xf32> to vector<128x1xf32>
    %111 = vector.broadcast %110 : vector<128x1xf32> to vector<128x128xf32>
    %112 = arith.subf %81, %111 : vector<128x128xf32>
    %113 = math.exp %112 : vector<128x128xf32>
    %cst_42 = arith.constant dense<0.000000e+00> : vector<128xf32>
    %114 = vector.multi_reduction <add>, %113, %cst_42 [1] : vector<128x128xf32> to vector<128xf32>
    %115 = vector.shape_cast %114 : vector<128xf32> to vector<128x1xf32>
    %116 = math.log %115 : vector<128x1xf32>
    %117 = arith.addf %116, %110 : vector<128x1xf32>
    %c32_i32_43 = arith.constant 32 : i32
    %118 = vector.broadcast %c32_i32_43 : i32 to vector<128x1xi32>
    %119 = arith.cmpi slt, %82, %118 : vector<128x1xi32>
    %c64_i32_44 = arith.constant 64 : i32
    %120 = vector.broadcast %c64_i32_44 : i32 to vector<128x1xi32>
    %121 = arith.cmpi slt, %82, %120 : vector<128x1xi32>
    %cst_45 = arith.constant 3.125000e-02 : f32
    %cst_46 = arith.constant 0.000000e+00 : f32
    %122 = vector.broadcast %cst_45 : f32 to vector<128x1xf32>
    %123 = vector.broadcast %cst_46 : f32 to vector<128x1xf32>
    %124 = arith.select %121, %122, %123 : vector<128x1xi1>, vector<128x1xf32>
    %cst_47 = arith.constant 3.125000e-02 : f32
    %125 = vector.broadcast %cst_47 : f32 to vector<128x1xf32>
    %126 = arith.select %119, %125, %124 : vector<128x1xi1>, vector<128x1xf32>
    %127 = arith.subf %117, %108 : vector<128x1xf32>
    %128 = arith.mulf %126, %127 : vector<128x1xf32>
    %129 = vector.shape_cast %128 : vector<128x1xf32> to vector<1x128x1xf32>
    %cst_48 = arith.constant dense<0.000000e+00> : vector<1xf32>
    %130 = vector.multi_reduction <add>, %129, %cst_48 [1, 2] : vector<1x128x1xf32> to vector<1xf32>
    %131 = vector.shape_cast %130 : vector<1xf32> to vector<1x1x1xf32>
    %132 = vector.extract %131[0, 0, 0] : f32 from vector<1x1x1xf32>
    %133 = vector.broadcast %132 : f32 to vector<1x1xf32>
    %134 = vector.extract %133[0, 0] : f32 from vector<1x1xf32>
    %c0_49 = arith.constant 0 : index
    %135 = memref.load %arg7[%c0_49] : memref<1xf32, #tpu.memory_space<smem>>
    memref.store %134, %arg7[%c0_49] : memref<1xf32, #tpu.memory_space<smem>>
    return
  }
  func.func @transform_0(%arg0: i32) -> (i32, i32) {
    %c0_i32 = arith.constant 0 : i32
    %c0_i32_0 = arith.constant 0 : i32
    %c0_i32_1 = arith.constant 0 : i32
    return %c0_i32, %c0_i32_0 : i32, i32
  }
  func.func @transform_1(%arg0: i32) -> (i32, i32) {
    %c0_i32 = arith.constant 0 : i32
    %c0_i32_0 = arith.constant 0 : i32
    %c0_i32_1 = arith.constant 0 : i32
    return %c0_i32, %c0_i32_0 : i32, i32
  }
  func.func @transform_2(%arg0: i32) -> (i32, i32) {
    %c0_i32 = arith.constant 0 : i32
    %c0_i32_0 = arith.constant 0 : i32
    %c0_i32_1 = arith.constant 0 : i32
    return %c0_i32, %c0_i32_0 : i32, i32
  }
  func.func @transform_3(%arg0: i32) -> (i32, i32) {
    %c0_i32 = arith.constant 0 : i32
    %c0_i32_0 = arith.constant 0 : i32
    %c0_i32_1 = arith.constant 0 : i32
    return %c0_i32, %c0_i32_0 : i32, i32
  }
  func.func @transform_4(%arg0: i32) -> (i32, i32) {
    %c0_i32 = arith.constant 0 : i32
    %c0_i32_0 = arith.constant 0 : i32
    %c0_i32_1 = arith.constant 0 : i32
    return %c0_i32, %c0_i32_0 : i32, i32
  }
  func.func @transform_5(%arg0: i32) -> (i32, i32) {
    %c0_i32 = arith.constant 0 : i32
    %c0_i32_0 = arith.constant 0 : i32
    %c0_i32_1 = arith.constant 0 : i32
    return %c0_i32, %c0_i32_0 : i32, i32
  }
  func.func @transform_6(%arg0: i32) -> i32 {
    %c0_i32 = arith.constant 0 : i32
    %c0_i32_0 = arith.constant 0 : i32
    return %c0_i32 : i32
  }
}

</mosaic_0001>

<llo_original>
// kernel: global_ssl_forward.1
$region0: #{global_ssl_forward.1}
  #allocation0 [shape = 'u32[]', space=smem, size = 0x4, offset = 0x4, fixed_abs, tag = 'smem constant byte address 0x4 - core index']
  #allocation1 [shape = 'u32[144,128]{1,0:T(1,128)}', space=vmem, size = 0x12000, scoped, tag = 'internal scratch']
  %s0 = inlined_call_operand.vmem [shape: s32[16,1], index: 0, kind: input, shape index: {}]
  %s1 = inlined_call_operand.vmem [shape: s32[16,1], index: 1, kind: input, shape index: {}]
  %s2 = inlined_call_operand.vmem [shape: f32[64,32], index: 2, kind: input, shape index: {}]
  %s3 = inlined_call_operand.vmem [shape: f32[64,32], index: 3, kind: input, shape index: {}]
  %s4 = inlined_call_operand.vmem [shape: f32[64,32], index: 4, kind: input, shape index: {}]
  %s5 = inlined_call_operand.vmem [shape: f32[64,32], index: 5, kind: input, shape index: {}]
  %s6 = inlined_call_operand.hbm [shape: f32[1], index: 6, kind: output, shape index: {}]
  %s7 = sld [smem:[#allocation0]]
  $region34: #{global_ssl_forward.1} parent=0
    _
  %s9 = ssub.s32 1, %s7
  %s10 = scalar_select 0, %s9, %s7
  $region1: #{global_ssl_forward.1} parent=0
    #allocation2 [shape = 'u8[512]{0}', space=smem, size = 0x200, scoped, tag = 'output window, operand 0, single buffered']
    #allocation3 [shape = 's32[1]{0}', space=sflag, size = 0x4, scoped, tag = 'scoped memory for global_ssl_forward.1']
    %11 = vsyncpa [#allocation3], 0
    // Predicated region
    $region2: #{global_ssl_forward.1} parent=1 // pred_check
      _
    $region3: #{global_ssl_forward.1} parent=1 // pred_check_branch
      %13 = sbr.rel (0) target = $region5
    $region4: #{global_ssl_forward.1} parent=1 // pred_region
      _
    $region5: #{global_ssl_forward.1} parent=1 // pred_fallthru
      _
    // Predicated region
    $region6: #{global_ssl_forward.1} parent=1 // pred_check
      _
    $region7: #{global_ssl_forward.1} parent=1 // pred_check_branch
      %15 = sbr.rel (0) target = $region9
    $region8: #{global_ssl_forward.1} parent=1 // pred_region
      _
    $region9: #{global_ssl_forward.1} parent=1 // pred_fallthru
      _
    // Predicated region
    $region10: #{global_ssl_forward.1} parent=1 // pred_check
      _
    $region11: #{global_ssl_forward.1} parent=1 // pred_check_branch
      %17 = sbr.rel (0) target = $region13
    $region12: #{global_ssl_forward.1} parent=1 // pred_region
      _
    $region13: #{global_ssl_forward.1} parent=1 // pred_fallthru
      _
    // Predicated region
    $region14: #{global_ssl_forward.1} parent=1 // pred_check
      _
    $region15: #{global_ssl_forward.1} parent=1 // pred_check_branch
      %19 = sbr.rel (0) target = $region17
    $region16: #{global_ssl_forward.1} parent=1 // pred_region
      _
    $region17: #{global_ssl_forward.1} parent=1 // pred_fallthru
      _
    // Predicated region
    $region18: #{global_ssl_forward.1} parent=1 // pred_check
      _
    $region19: #{global_ssl_forward.1} parent=1 // pred_check_branch
      %21 = sbr.rel (0) target = $region21
    $region20: #{global_ssl_forward.1} parent=1 // pred_region
      _
    $region21: #{global_ssl_forward.1} parent=1 // pred_fallthru
      _
    // Predicated region
    $region22: #{global_ssl_forward.1} parent=1 // pred_check
      _
    $region23: #{global_ssl_forward.1} parent=1 // pred_check_branch
      %23 = sbr.rel (0) target = $region25
    $region24: #{global_ssl_forward.1} parent=1 // pred_region
      _
    $region25: #{global_ssl_forward.1} parent=1 // pred_fallthru
      _
    %v24 = vld [vmem:[%s0] sm:$0xff]
    %v25 = vld [vmem:[%s0 + $0x8] sm:$0xff]
    %v26 = vld [vmem:[%s2] sm:$0xff]
    %v27 = vld [vmem:[%s2 + $0x8] sm:$0xff]
    %v28 = vld [vmem:[%s2 + $0x10] sm:$0xff]
    %v29 = vld [vmem:[%s2 + $0x18] sm:$0xff]
    %v30 = vld [vmem:[%s2 + $0x20] sm:$0xff]
    %v31 = vld [vmem:[%s2 + $0x28] sm:$0xff]
    %v32 = vld [vmem:[%s2 + $0x30] sm:$0xff]
    %v33 = vld [vmem:[%s2 + $0x38] sm:$0xff]
    %v34 = vlaneseq
    %v35 = vand.u32 %v34, 127
    %36 = vset.pattern.permute.xlu0 0
    %37 = vperm.xlu0 %36, %v24
    %v38 = vpop.permute.xlu0 %37
    %39 = vset.pattern.permute.xlu0 0
    %40 = vperm.xlu0 %39, %v25
    %v41 = vpop.permute.xlu0 %40
    %vm42 = vcmp.eq.s32.totalorder %v35, %v38
    %vm43 = vcmp.eq.s32.totalorder %v35, %v41
    %v44 = vsel %vm42, 1, 0
    %v45 = vsel %vm43, 1, 0
    %v46 = vcvt.s32.f32 %v44
    %v47 = vcvt.s32.f32 %v45
    %vm48 = vcmask 523264
    %v50 = vsel %vm48, %v46, 0
    %v53 = vsel %vm48, %v47, 0
    %55 = vmatprep.subr.mxu0 0.0
    %56 = vmatpush1.msra.mxu0 0.0
    %57 = vmatprep.subr.mxu0 0.0
    %58 = vmatpush1.msra.mxu0 0.0
    %59 = vmatprep.subr.mxu0 0.0
    %60 = vmatpush1.msra.mxu0 0.0
    %61 = vmatprep.subr.mxu0 0.0
    %62 = vmatpush1.msra.mxu0 0.0
    %63 = vmatprep.subr.mxu0 0.0
    %64 = vmatpush1.msra.mxu0 0.0
    %65 = vmatprep.subr.mxu0 0.0
    %66 = vmatpush1.msra.mxu0 0.0
    %67 = vmatprep.subr.mxu0 0.0
    %68 = vmatpush1.msra.mxu0 0.0
    %69 = vmatprep.subr.mxu0 0.0
    %70 = vmatpush1.msra.mxu0 0.0
    %71 = vmatprep.subr.mxu0 0.0
    %72 = vmatpush1.msra.mxu0 %v33
    %73 = vmatprep.subr.mxu0 0.0
    %74 = vmatpush1.msra.mxu0 %v32
    %75 = vmatprep.subr.mxu0 0.0
    %76 = vmatpush1.msra.mxu0 %v31
    %77 = vmatprep.subr.mxu0 0.0
    %78 = vmatpush1.msra.mxu0 %v30
    %79 = vmatprep.subr.mxu0 0.0
    %80 = vmatpush1.msra.mxu0 %v29
    %81 = vmatprep.subr.mxu0 0.0
    %82 = vmatpush1.msra.mxu0 %v28
    %83 = vmatprep.subr.mxu0 0.0
    %84 = vmatpush1.msra.mxu0 %v27
    %85 = vmatprep.subr.mxu0 0.0
    %86 = vmatpush1.msra.mxu0 %v26
    %87 = vmatprep.subr.mxu0 0.0
    %88 = vmatpush2.msra.mxu0 0.0
    %89 = vmatprep.subr.mxu0 0.0
    %90 = vmatpush2.msra.mxu0 0.0
    %91 = vmatprep.subr.mxu0 0.0
    %92 = vmatpush2.msra.mxu0 0.0
    %93 = vmatprep.subr.mxu0 0.0
    %94 = vmatpush2.msra.mxu0 0.0
    %95 = vmatprep.subr.mxu0 0.0
    %96 = vmatpush2.msra.mxu0 0.0
    %97 = vmatprep.subr.mxu0 0.0
    %98 = vmatpush2.msra.mxu0 0.0
    %99 = vmatprep.subr.mxu0 0.0
    %100 = vmatpush2.msra.mxu0 0.0
    %101 = vmatprep.subr.mxu0 0.0
    %102 = vmatpush2.msra.mxu0 0.0
    %103 = vmatprep.subr.mxu0 0.0
    %104 = vmatpush2.msra.mxu0 0.0
    %105 = vmatprep.subr.mxu0 0.0
    %106 = vmatpush2.msra.mxu0 0.0
    %107 = vmatprep.subr.mxu0 0.0
    %108 = vmatpush2.msra.mxu0 0.0
    %109 = vmatprep.subr.mxu0 0.0
    %110 = vmatpush2.msra.mxu0 0.0
    %111 = vmatprep.subr.mxu0 0.0
    %112 = vmatpush2.msra.mxu0 0.0
    %113 = vmatprep.subr.mxu0 0.0
    %114 = vmatpush2.msra.mxu0 0.0
    %115 = vmatprep.subr.mxu0 0.0
    %116 = vmatpush2.msra.mxu0 0.0
    %117 = vmatprep.subr.mxu0 0.0
    %118 = vmatpush2.msra.mxu0 0.0
    %119 = vmatprep.mubr.f32.mxu0 0.0
    %120 = vmatmul.mubr.f32.gmra.mxu0 %v50
    %v121 = vpop.f32.mrf.mxu0
    %v122 = vadd.f32 0.0, %v121
    %v123 = vpop.f32.mrf.mxu0
    %124 = vmatprep.mubr.f32.mxu0 0.0
    %125 = vmatmul.mubr.f32.gmra.mxu0 %v53
    %v126 = vpop.f32.mrf.mxu0
    %v127 = vadd.f32 0.0, %v126
    %v128 = vpop.f32.mrf.mxu0
    %129 = vdwg.mxu0
    %v130 = vld [vmem:[%s3] sm:$0xff]
    %v131 = vld [vmem:[%s3 + $0x8] sm:$0xff]
    %v132 = vld [vmem:[%s3 + $0x10] sm:$0xff]
    %v133 = vld [vmem:[%s3 + $0x18] sm:$0xff]
    %v134 = vld [vmem:[%s3 + $0x20] sm:$0xff]
    %v135 = vld [vmem:[%s3 + $0x28] sm:$0xff]
    %v136 = vld [vmem:[%s3 + $0x30] sm:$0xff]
    %v137 = vld [vmem:[%s3 + $0x38] sm:$0xff]
    %138 = vmatprep.subr.mxu0 0.0
    %139 = vmatpush1.msra.mxu0 0.0
    %140 = vmatprep.subr.mxu0 0.0
    %141 = vmatpush1.msra.mxu0 0.0
    %142 = vmatprep.subr.mxu0 0.0
    %143 = vmatpush1.msra.mxu0 0.0
    %144 = vmatprep.subr.mxu0 0.0
    %145 = vmatpush1.msra.mxu0 0.0
    %146 = vmatprep.subr.mxu0 0.0
    %147 = vmatpush1.msra.mxu0 0.0
    %148 = vmatprep.subr.mxu0 0.0
    %149 = vmatpush1.msra.mxu0 0.0
    %150 = vmatprep.subr.mxu0 0.0
    %151 = vmatpush1.msra.mxu0 0.0
    %152 = vmatprep.subr.mxu0 0.0
    %153 = vmatpush1.msra.mxu0 0.0
    %154 = vmatprep.subr.mxu0 0.0
    %155 = vmatpush1.msra.mxu0 %v137
    %156 = vmatprep.subr.mxu0 0.0
    %157 = vmatpush1.msra.mxu0 %v136
    %158 = vmatprep.subr.mxu0 0.0
    %159 = vmatpush1.msra.mxu0 %v135
    %160 = vmatprep.subr.mxu0 0.0
    %161 = vmatpush1.msra.mxu0 %v134
    %162 = vmatprep.subr.mxu0 0.0
    %163 = vmatpush1.msra.mxu0 %v133
    %164 = vmatprep.subr.mxu0 0.0
    %165 = vmatpush1.msra.mxu0 %v132
    %166 = vmatprep.subr.mxu0 0.0
    %167 = vmatpush1.msra.mxu0 %v131
    %168 = vmatprep.subr.mxu0 0.0
    %169 = vmatpush1.msra.mxu0 %v130
    %170 = vmatprep.subr.mxu0 0.0
    %171 = vmatpush2.msra.mxu0 0.0
    %172 = vmatprep.subr.mxu0 0.0
    %173 = vmatpush2.msra.mxu0 0.0
    %174 = vmatprep.subr.mxu0 0.0
    %175 = vmatpush2.msra.mxu0 0.0
    %176 = vmatprep.subr.mxu0 0.0
    %177 = vmatpush2.msra.mxu0 0.0
    %178 = vmatprep.subr.mxu0 0.0
    %179 = vmatpush2.msra.mxu0 0.0
    %180 = vmatprep.subr.mxu0 0.0
    %181 = vmatpush2.msra.mxu0 0.0
    %182 = vmatprep.subr.mxu0 0.0
    %183 = vmatpush2.msra.mxu0 0.0
    %184 = vmatprep.subr.mxu0 0.0
    %185 = vmatpush2.msra.mxu0 0.0
    %186 = vmatprep.subr.mxu0 0.0
    %187 = vmatpush2.msra.mxu0 0.0
    %188 = vmatprep.subr.mxu0 0.0
    %189 = vmatpush2.msra.mxu0 0.0
    %190 = vmatprep.subr.mxu0 0.0
    %191 = vmatpush2.msra.mxu0 0.0
    %192 = vmatprep.subr.mxu0 0.0
    %193 = vmatpush2.msra.mxu0 0.0
    %194 = vmatprep.subr.mxu0 0.0
    %195 = vmatpush2.msra.mxu0 0.0
    %196 = vmatprep.subr.mxu0 0.0
    %197 = vmatpush2.msra.mxu0 0.0
    %198 = vmatprep.subr.mxu0 0.0
    %199 = vmatpush2.msra.mxu0 0.0
    %200 = vmatprep.subr.mxu0 0.0
    %201 = vmatpush2.msra.mxu0 0.0
    %202 = vmatprep.mubr.f32.mxu0 0.0
    %203 = vmatmul.mubr.f32.gmra.mxu0 %v50
    %v204 = vpop.f32.mrf.mxu0
    %v205 = vadd.f32 0.0, %v204
    %v206 = vpop.f32.mrf.mxu0
    %207 = vmatprep.mubr.f32.mxu0 0.0
    %208 = vmatmul.mubr.f32.gmra.mxu0 %v53
    %v209 = vpop.f32.mrf.mxu0
    %v210 = vadd.f32 0.0, %v209
    %v211 = vpop.f32.mrf.mxu0
    %212 = vdwg.mxu0
    %v213 = vld [vmem:[%s1] sm:$0xff]
    %v214 = vld [vmem:[%s1 + $0x8] sm:$0xff]
    %v215 = vld [vmem:[%s4] sm:$0xff]
    %v216 = vld [vmem:[%s4 + $0x8] sm:$0xff]
    %v217 = vld [vmem:[%s4 + $0x10] sm:$0xff]
    %v218 = vld [vmem:[%s4 + $0x18] sm:$0xff]
    %v219 = vld [vmem:[%s4 + $0x20] sm:$0xff]
    %v220 = vld [vmem:[%s4 + $0x28] sm:$0xff]
    %v221 = vld [vmem:[%s4 + $0x30] sm:$0xff]
    %v222 = vld [vmem:[%s4 + $0x38] sm:$0xff]
    %223 = vset.pattern.permute.xlu0 0
    %224 = vperm.xlu0 %223, %v213
    %v225 = vpop.permute.xlu0 %224
    %226 = vset.pattern.permute.xlu0 0
    %227 = vperm.xlu0 %226, %v214
    %v228 = vpop.permute.xlu0 %227
    %vm229 = vcmp.eq.s32.totalorder %v35, %v225
    %vm230 = vcmp.eq.s32.totalorder %v35, %v228
    %v231 = vsel %vm229, 1, 0
    %v232 = vsel %vm230, 1, 0
    %v233 = vcvt.s32.f32 %v231
    %v234 = vcvt.s32.f32 %v232
    %v236 = vsel %vm48, %v233, 0
    %v239 = vsel %vm48, %v234, 0
    %241 = vmatprep.subr.mxu0 0.0
    %242 = vmatpush1.msra.mxu0 0.0
    %243 = vmatprep.subr.mxu0 0.0
    %244 = vmatpush1.msra.mxu0 0.0
    %245 = vmatprep.subr.mxu0 0.0
    %246 = vmatpush1.msra.mxu0 0.0
    %247 = vmatprep.subr.mxu0 0.0
    %248 = vmatpush1.msra.mxu0 0.0
    %249 = vmatprep.subr.mxu0 0.0
    %250 = vmatpush1.msra.mxu0 0.0
    %251 = vmatprep.subr.mxu0 0.0
    %252 = vmatpush1.msra.mxu0 0.0
    %253 = vmatprep.subr.mxu0 0.0
    %254 = vmatpush1.msra.mxu0 0.0
    %255 = vmatprep.subr.mxu0 0.0
    %256 = vmatpush1.msra.mxu0 0.0
    %257 = vmatprep.subr.mxu0 0.0
    %258 = vmatpush1.msra.mxu0 %v222
    %259 = vmatprep.subr.mxu0 0.0
    %260 = vmatpush1.msra.mxu0 %v221
    %261 = vmatprep.subr.mxu0 0.0
    %262 = vmatpush1.msra.mxu0 %v220
    %263 = vmatprep.subr.mxu0 0.0
    %264 = vmatpush1.msra.mxu0 %v219
    %265 = vmatprep.subr.mxu0 0.0
    %266 = vmatpush1.msra.mxu0 %v218
    %267 = vmatprep.subr.mxu0 0.0
    %268 = vmatpush1.msra.mxu0 %v217
    %269 = vmatprep.subr.mxu0 0.0
    %270 = vmatpush1.msra.mxu0 %v216
    %271 = vmatprep.subr.mxu0 0.0
    %272 = vmatpush1.msra.mxu0 %v215
    %273 = vmatprep.subr.mxu0 0.0
    %274 = vmatpush2.msra.mxu0 0.0
    %275 = vmatprep.subr.mxu0 0.0
    %276 = vmatpush2.msra.mxu0 0.0
    %277 = vmatprep.subr.mxu0 0.0
    %278 = vmatpush2.msra.mxu0 0.0
    %279 = vmatprep.subr.mxu0 0.0
    %280 = vmatpush2.msra.mxu0 0.0
    %281 = vmatprep.subr.mxu0 0.0
    %282 = vmatpush2.msra.mxu0 0.0
    %283 = vmatprep.subr.mxu0 0.0
    %284 = vmatpush2.msra.mxu0 0.0
    %285 = vmatprep.subr.mxu0 0.0
    %286 = vmatpush2.msra.mxu0 0.0
    %287 = vmatprep.subr.mxu0 0.0
    %288 = vmatpush2.msra.mxu0 0.0
    %289 = vmatprep.subr.mxu0 0.0
    %290 = vmatpush2.msra.mxu0 0.0
    %291 = vmatprep.subr.mxu0 0.0
    %292 = vmatpush2.msra.mxu0 0.0
    %293 = vmatprep.subr.mxu0 0.0
    %294 = vmatpush2.msra.mxu0 0.0
    %295 = vmatprep.subr.mxu0 0.0
    %296 = vmatpush2.msra.mxu0 0.0
    %297 = vmatprep.subr.mxu0 0.0
    %298 = vmatpush2.msra.mxu0 0.0
    %299 = vmatprep.subr.mxu0 0.0
    %300 = vmatpush2.msra.mxu0 0.0
    %301 = vmatprep.subr.mxu0 0.0
    %302 = vmatpush2.msra.mxu0 0.0
    %303 = vmatprep.subr.mxu0 0.0
    %304 = vmatpush2.msra.mxu0 0.0
    %305 = vmatprep.mubr.f32.mxu0 0.0
    %306 = vmatmul.mubr.f32.gmra.mxu0 %v236
    %v307 = vpop.f32.mrf.mxu0
    %v308 = vadd.f32 0.0, %v307
    %v309 = vpop.f32.mrf.mxu0
    %310 = vmatprep.mubr.f32.mxu0 0.0
    %311 = vmatmul.mubr.f32.gmra.mxu0 %v239
    %v312 = vpop.f32.mrf.mxu0
    %v313 = vadd.f32 0.0, %v312
    %v314 = vpop.f32.mrf.mxu0
    %315 = vdwg.mxu0
    %v316 = vld [vmem:[%s5] sm:$0xff]
    %v317 = vld [vmem:[%s5 + $0x8] sm:$0xff]
    %v318 = vld [vmem:[%s5 + $0x10] sm:$0xff]
    %v319 = vld [vmem:[%s5 + $0x18] sm:$0xff]
    %v320 = vld [vmem:[%s5 + $0x20] sm:$0xff]
    %v321 = vld [vmem:[%s5 + $0x28] sm:$0xff]
    %v322 = vld [vmem:[%s5 + $0x30] sm:$0xff]
    %v323 = vld [vmem:[%s5 + $0x38] sm:$0xff]
    %324 = vmatprep.subr.mxu0 0.0
    %325 = vmatpush1.msra.mxu0 0.0
    %326 = vmatprep.subr.mxu0 0.0
    %327 = vmatpush1.msra.mxu0 0.0
    %328 = vmatprep.subr.mxu0 0.0
    %329 = vmatpush1.msra.mxu0 0.0
    %330 = vmatprep.subr.mxu0 0.0
    %331 = vmatpush1.msra.mxu0 0.0
    %332 = vmatprep.subr.mxu0 0.0
    %333 = vmatpush1.msra.mxu0 0.0
    %334 = vmatprep.subr.mxu0 0.0
    %335 = vmatpush1.msra.mxu0 0.0
    %336 = vmatprep.subr.mxu0 0.0
    %337 = vmatpush1.msra.mxu0 0.0
    %338 = vmatprep.subr.mxu0 0.0
    %339 = vmatpush1.msra.mxu0 0.0
    %340 = vmatprep.subr.mxu0 0.0
    %341 = vmatpush1.msra.mxu0 %v323
    %342 = vmatprep.subr.mxu0 0.0
    %343 = vmatpush1.msra.mxu0 %v322
    %344 = vmatprep.subr.mxu0 0.0
    %345 = vmatpush1.msra.mxu0 %v321
    %346 = vmatprep.subr.mxu0 0.0
    %347 = vmatpush1.msra.mxu0 %v320
    %348 = vmatprep.subr.mxu0 0.0
    %349 = vmatpush1.msra.mxu0 %v319
    %350 = vmatprep.subr.mxu0 0.0
    %351 = vmatpush1.msra.mxu0 %v318
    %352 = vmatprep.subr.mxu0 0.0
    %353 = vmatpush1.msra.mxu0 %v317
    %354 = vmatprep.subr.mxu0 0.0
    %355 = vmatpush1.msra.mxu0 %v316
    %356 = vmatprep.subr.mxu0 0.0
    %357 = vmatpush2.msra.mxu0 0.0
    %358 = vmatprep.subr.mxu0 0.0
    %359 = vmatpush2.msra.mxu0 0.0
    %360 = vmatprep.subr.mxu0 0.0
    %361 = vmatpush2.msra.mxu0 0.0
    %362 = vmatprep.subr.mxu0 0.0
    %363 = vmatpush2.msra.mxu0 0.0
    %364 = vmatprep.subr.mxu0 0.0
    %365 = vmatpush2.msra.mxu0 0.0
    %366 = vmatprep.subr.mxu0 0.0
    %367 = vmatpush2.msra.mxu0 0.0
    %368 = vmatprep.subr.mxu0 0.0
    %369 = vmatpush2.msra.mxu0 0.0
    %370 = vmatprep.subr.mxu0 0.0
    %371 = vmatpush2.msra.mxu0 0.0
    %372 = vmatprep.subr.mxu0 0.0
    %373 = vmatpush2.msra.mxu0 0.0
    %374 = vmatprep.subr.mxu0 0.0
    %375 = vmatpush2.msra.mxu0 0.0
    %376 = vmatprep.subr.mxu0 0.0
    %377 = vmatpush2.msra.mxu0 0.0
    %378 = vmatprep.subr.mxu0 0.0
    %379 = vmatpush2.msra.mxu0 0.0
    %380 = vmatprep.subr.mxu0 0.0
    %381 = vmatpush2.msra.mxu0 0.0
    %382 = vmatprep.subr.mxu0 0.0
    %383 = vmatpush2.msra.mxu0 0.0
    %384 = vmatprep.subr.mxu0 0.0
    %385 = vmatpush2.msra.mxu0 0.0
    %386 = vmatprep.subr.mxu0 0.0
    %387 = vmatpush2.msra.mxu0 0.0
    %388 = vmatprep.mubr.f32.mxu0 0.0
    %389 = vmatmul.mubr.f32.gmra.mxu0 %v236
    %v390 = vpop.f32.mrf.mxu0
    %v391 = vadd.f32 0.0, %v390
    %v392 = vpop.f32.mrf.mxu0
    %393 = vmatprep.mubr.f32.mxu0 0.0
    %394 = vmatmul.mubr.f32.gmra.mxu0 %v239
    %v395 = vpop.f32.mrf.mxu0
    %v396 = vadd.f32 0.0, %v395
    %v397 = vpop.f32.mrf.mxu0
    %398 = vdwg.mxu0
    %v399 = vmul.f32 %v122, %v122
    %v400 = vmul.f32 %v127, %v127
    %vm401 = vcmask 261120
    %v402 = vsel %vm401, %v399, 0.0
    %403 = vadd.xlane.f32.xlu0 %v402
    %v404 = vpop.xlane.xlu0 %403
    %v405 = vsel %vm401, %v400, 0.0
    %406 = vadd.xlane.f32.xlu0 %v405
    %v407 = vpop.xlane.xlu0 %406
    %v408 = vmax.f32 %v404, 1e-24
    %v409 = vmax.f32 %v407, 1e-24
    %v410 = vrsqrt.pop %v408
    %v411 = vrsqrt.pop %v409
    %v412 = vmul.f32 %v122, %v410
    %v413 = vmul.f32 %v127, %v411
    %v414 = vmul.f32 %v412, 2.236068
    %v415 = vmul.f32 %v413, 2.236068
    %v416 = vmul.f32 %v205, %v205
    %v417 = vmul.f32 %v210, %v210
    %v418 = vsel %vm401, %v416, 0.0
    %419 = vadd.xlane.f32.xlu0 %v418
    %v420 = vpop.xlane.xlu0 %419
    %v421 = vsel %vm401, %v417, 0.0
    %422 = vadd.xlane.f32.xlu0 %v421
    %v423 = vpop.xlane.xlu0 %422
    %v424 = vmax.f32 %v420, 1e-24
    %v425 = vmax.f32 %v423, 1e-24
    %v426 = vrsqrt.pop %v424
    %v427 = vrsqrt.pop %v425
    %v428 = vmul.f32 %v205, %v426
    %v429 = vmul.f32 %v210, %v427
    %v430 = vmul.f32 %v428, 2.236068
    %v431 = vmul.f32 %v429, 2.236068
    %v432 = vmul.f32 %v308, 2.236068
    %v433 = vmul.f32 %v313, 2.236068
    %v434 = vmul.f32 %v391, 2.236068
    %v435 = vmul.f32 %v396, 2.236068
    %v437 = vsel %vm401, %v414, 0
    %v440 = vsel %vm401, %v415, 0
    %v443 = vsel %vm401, %v430, 0
    %v446 = vsel %vm401, %v431, 0
    %v449 = vsel %vm401, %v432, 0
    %v452 = vsel %vm401, %v433, 0
    %v455 = vsel %vm401, %v434, 0
    %v458 = vsel %vm401, %v435, 0
    %v461 = vsel %vm401, 0.0, 0
    %463 = vmatprep.subr.mxu0 0.0
    %464 = vmatpush1.xpose.msra.mxu0 %v461
    %465 = vmatprep.subr.mxu0 0.0
    %466 = vmatpush1.xpose.msra.mxu0 %v461
    %467 = vmatprep.subr.mxu0 0.0
    %468 = vmatpush1.xpose.msra.mxu0 %v461
    %469 = vmatprep.subr.mxu0 0.0
    %470 = vmatpush1.xpose.msra.mxu0 %v461
    %471 = vmatprep.subr.mxu0 0.0
    %472 = vmatpush1.xpose.msra.mxu0 %v461
    %473 = vmatprep.subr.mxu0 0.0
    %474 = vmatpush1.xpose.msra.mxu0 %v461
    %475 = vmatprep.subr.mxu0 0.0
    %476 = vmatpush1.xpose.msra.mxu0 %v461
    %477 = vmatprep.subr.mxu0 0.0
    %478 = vmatpush1.xpose.msra.mxu0 %v461
    %479 = vmatprep.subr.mxu0 0.0
    %480 = vmatpush1.xpose.msra.mxu0 %v458
    %481 = vmatprep.subr.mxu0 0.0
    %482 = vmatpush1.xpose.msra.mxu0 %v455
    %483 = vmatprep.subr.mxu0 0.0
    %484 = vmatpush1.xpose.msra.mxu0 %v452
    %485 = vmatprep.subr.mxu0 0.0
    %486 = vmatpush1.xpose.msra.mxu0 %v449
    %487 = vmatprep.subr.mxu0 0.0
    %488 = vmatpush1.xpose.msra.mxu0 %v446
    %489 = vmatprep.subr.mxu0 0.0
    %490 = vmatpush1.xpose.msra.mxu0 %v443
    %491 = vmatprep.subr.mxu0 0.0
    %492 = vmatpush1.xpose.msra.mxu0 %v440
    %493 = vmatprep.subr.mxu0 0.0
    %494 = vmatpush1.xpose.msra.mxu0 %v437
    %495 = vmatprep.subr.mxu0 0.0
    %496 = vmatpush2.xpose.msra.mxu0 0.0
    %497 = vmatprep.subr.mxu0 0.0
    %498 = vmatpush2.xpose.msra.mxu0 0.0
    %499 = vmatprep.subr.mxu0 0.0
    %500 = vmatpush2.xpose.msra.mxu0 0.0
    %501 = vmatprep.subr.mxu0 0.0
    %502 = vmatpush2.xpose.msra.mxu0 0.0
    %503 = vmatprep.subr.mxu0 0.0
    %504 = vmatpush2.xpose.msra.mxu0 0.0
    %505 = vmatprep.subr.mxu0 0.0
    %506 = vmatpush2.xpose.msra.mxu0 0.0
    %507 = vmatprep.subr.mxu0 0.0
    %508 = vmatpush2.xpose.msra.mxu0 0.0
    %509 = vmatprep.subr.mxu0 0.0
    %510 = vmatpush2.xpose.msra.mxu0 0.0
    %511 = vmatprep.subr.mxu0 0.0
    %512 = vmatpush2.xpose.msra.mxu0 0.0
    %513 = vmatprep.subr.mxu0 0.0
    %514 = vmatpush2.xpose.msra.mxu0 0.0
    %515 = vmatprep.subr.mxu0 0.0
    %516 = vmatpush2.xpose.msra.mxu0 0.0
    %517 = vmatprep.subr.mxu0 0.0
    %518 = vmatpush2.xpose.msra.mxu0 0.0
    %519 = vmatprep.subr.mxu0 0.0
    %520 = vmatpush2.xpose.msra.mxu0 0.0
    %521 = vmatprep.subr.mxu0 0.0
    %522 = vmatpush2.xpose.msra.mxu0 0.0
    %523 = vmatprep.subr.mxu0 0.0
    %524 = vmatpush2.xpose.msra.mxu0 0.0
    %525 = vmatprep.subr.mxu0 0.0
    %526 = vmatpush2.xpose.msra.mxu0 0.0
    %527 = vmatprep.mubr.f32.mxu0 0.0
    %528 = vmatmul.mubr.f32.gmra.mxu0 %v437
    %v529 = vpop.f32.mrf.mxu0
    %v530 = vadd.f32 0.0, %v529
    %v531 = vpop.f32.mrf.mxu0
    %532 = vmatprep.mubr.f32.mxu0 0.0
    %533 = vmatmul.mubr.f32.gmra.mxu0 %v440
    %v534 = vpop.f32.mrf.mxu0
    %v535 = vadd.f32 0.0, %v534
    %v536 = vpop.f32.mrf.mxu0
    %537 = vmatprep.mubr.f32.mxu0 0.0
    %538 = vmatmul.mubr.f32.gmra.mxu0 %v443
    %v539 = vpop.f32.mrf.mxu0
    %v540 = vadd.f32 0.0, %v539
    %v541 = vpop.f32.mrf.mxu0
    %542 = vmatprep.mubr.f32.mxu0 0.0
    %543 = vmatmul.mubr.f32.gmra.mxu0 %v446
    %v544 = vpop.f32.mrf.mxu0
    %v545 = vadd.f32 0.0, %v544
    %v546 = vpop.f32.mrf.mxu0
    %547 = vmatprep.mubr.f32.mxu0 0.0
    %548 = vmatmul.mubr.f32.gmra.mxu0 %v449
    %v549 = vpop.f32.mrf.mxu0
    %v550 = vadd.f32 0.0, %v549
    %v551 = vpop.f32.mrf.mxu0
    %552 = vmatprep.mubr.f32.mxu0 0.0
    %553 = vmatmul.mubr.f32.gmra.mxu0 %v452
    %v554 = vpop.f32.mrf.mxu0
    %v555 = vadd.f32 0.0, %v554
    %v556 = vpop.f32.mrf.mxu0
    %557 = vmatprep.mubr.f32.mxu0 0.0
    %558 = vmatmul.mubr.f32.gmra.mxu0 %v455
    %v559 = vpop.f32.mrf.mxu0
    %v560 = vadd.f32 0.0, %v559
    %v561 = vpop.f32.mrf.mxu0
    %562 = vmatprep.mubr.f32.mxu0 0.0
    %563 = vmatmul.mubr.f32.gmra.mxu0 %v458
    %v564 = vpop.f32.mrf.mxu0
    %v565 = vadd.f32 0.0, %v564
    %v566 = vpop.f32.mrf.mxu0
    %567 = vmatprep.mubr.f32.mxu0 0.0
    %568 = vmatmul.mubr.f32.gmra.mxu0 %v461
    %v569 = vpop.f32.mrf.mxu0
    %v570 = vadd.f32 0.0, %v569
    %v571 = vpop.f32.mrf.mxu0
    %572 = vmatprep.mubr.f32.mxu0 0.0
    %573 = vmatmul.mubr.f32.gmra.mxu0 %v461
    %v574 = vpop.f32.mrf.mxu0
    %v575 = vadd.f32 0.0, %v574
    %v576 = vpop.f32.mrf.mxu0
    %577 = vmatprep.mubr.f32.mxu0 0.0
    %578 = vmatmul.mubr.f32.gmra.mxu0 %v461
    %v579 = vpop.f32.mrf.mxu0
    %v580 = vadd.f32 0.0, %v579
    %v581 = vpop.f32.mrf.mxu0
    %582 = vmatprep.mubr.f32.mxu0 0.0
    %583 = vmatmul.mubr.f32.gmra.mxu0 %v461
    %v584 = vpop.f32.mrf.mxu0
    %v585 = vadd.f32 0.0, %v584
    %v586 = vpop.f32.mrf.mxu0
    %587 = vmatprep.mubr.f32.mxu0 0.0
    %588 = vmatmul.mubr.f32.gmra.mxu0 %v461
    %v589 = vpop.f32.mrf.mxu0
    %v590 = vadd.f32 0.0, %v589
    %v591 = vpop.f32.mrf.mxu0
    %592 = vmatprep.mubr.f32.mxu0 0.0
    %593 = vmatmul.mubr.f32.gmra.mxu0 %v461
    %v594 = vpop.f32.mrf.mxu0
    %v595 = vadd.f32 0.0, %v594
    %v596 = vpop.f32.mrf.mxu0
    %597 = vmatprep.mubr.f32.mxu0 0.0
    %598 = vmatmul.mubr.f32.gmra.mxu0 %v461
    %v599 = vpop.f32.mrf.mxu0
    %v600 = vadd.f32 0.0, %v599
    %v601 = vpop.f32.mrf.mxu0
    %602 = vmatprep.mubr.f32.mxu0 0.0
    %603 = vmatmul.mubr.f32.gmra.mxu0 %v461
    %v604 = vpop.f32.mrf.mxu0
    %v605 = vadd.f32 0.0, %v604
    %v606 = vpop.f32.mrf.mxu0
    %607 = vdwg.mxu0
    %v608 = vlaneseq
    %v609 = vshrl.u32 %v608, 7
    %v610 = vadd.s32 %v609, 8
    %v611 = vadd.s32 %v609, 16
    %v612 = vadd.s32 %v609, 24
    %v613 = vadd.s32 %v609, 32
    %v614 = vadd.s32 %v609, 40
    %v615 = vadd.s32 %v609, 48
    %v616 = vadd.s32 %v609, 56
    %v617 = vadd.s32 %v609, 64
    %v618 = vadd.s32 %v609, 72
    %v619 = vadd.s32 %v609, 80
    %v620 = vadd.s32 %v609, 88
    %v621 = vadd.s32 %v609, 96
    %v622 = vadd.s32 %v609, 104
    %v623 = vadd.s32 %v609, 112
    %v624 = vadd.s32 %v609, 120
    %vm625 = vcmp.lt.s32.totalorder %v609, 32
    %vm626 = vcmp.lt.s32.totalorder %v610, 32
    %vm627 = vcmp.lt.s32.totalorder %v611, 32
    %vm628 = vcmp.lt.s32.totalorder %v612, 32
    %vm629 = vcmp.lt.s32.totalorder %v613, 32
    %vm630 = vcmp.lt.s32.totalorder %v614, 32
    %vm631 = vcmp.lt.s32.totalorder %v615, 32
    %vm632 = vcmp.lt.s32.totalorder %v616, 32
    %vm633 = vcmp.lt.s32.totalorder %v617, 32
    %vm634 = vcmp.lt.s32.totalorder %v618, 32
    %vm635 = vcmp.lt.s32.totalorder %v619, 32
    %vm636 = vcmp.lt.s32.totalorder %v620, 32
    %vm637 = vcmp.lt.s32.totalorder %v621, 32
    %vm638 = vcmp.lt.s32.totalorder %v622, 32
    %vm639 = vcmp.lt.s32.totalorder %v623, 32
    %vm640 = vcmp.lt.s32.totalorder %v624, 32
    %vm641 = vcmp.ge.s32.totalorder %v609, 32
    %vm642 = vcmp.ge.s32.totalorder %v610, 32
    %vm643 = vcmp.ge.s32.totalorder %v611, 32
    %vm644 = vcmp.ge.s32.totalorder %v612, 32
    %vm645 = vcmp.ge.s32.totalorder %v613, 32
    %vm646 = vcmp.ge.s32.totalorder %v614, 32
    %vm647 = vcmp.ge.s32.totalorder %v615, 32
    %vm648 = vcmp.ge.s32.totalorder %v616, 32
    %vm649 = vcmp.ge.s32.totalorder %v617, 32
    %vm650 = vcmp.ge.s32.totalorder %v618, 32
    %vm651 = vcmp.ge.s32.totalorder %v619, 32
    %vm652 = vcmp.ge.s32.totalorder %v620, 32
    %vm653 = vcmp.ge.s32.totalorder %v621, 32
    %vm654 = vcmp.ge.s32.totalorder %v622, 32
    %vm655 = vcmp.ge.s32.totalorder %v623, 32
    %vm656 = vcmp.ge.s32.totalorder %v624, 32
    %vm657 = vcmp.lt.s32.totalorder %v609, 64
    %vm658 = vcmp.lt.s32.totalorder %v610, 64
    %vm659 = vcmp.lt.s32.totalorder %v611, 64
    %vm660 = vcmp.lt.s32.totalorder %v612, 64
    %vm661 = vcmp.lt.s32.totalorder %v613, 64
    %vm662 = vcmp.lt.s32.totalorder %v614, 64
    %vm663 = vcmp.lt.s32.totalorder %v615, 64
    %vm664 = vcmp.lt.s32.totalorder %v616, 64
    %vm665 = vcmp.lt.s32.totalorder %v617, 64
    %vm666 = vcmp.lt.s32.totalorder %v618, 64
    %vm667 = vcmp.lt.s32.totalorder %v619, 64
    %vm668 = vcmp.lt.s32.totalorder %v620, 64
    %vm669 = vcmp.lt.s32.totalorder %v621, 64
    %vm670 = vcmp.lt.s32.totalorder %v622, 64
    %vm671 = vcmp.lt.s32.totalorder %v623, 64
    %vm672 = vcmp.lt.s32.totalorder %v624, 64
    %vm673 = vmand %vm641, %vm657
    %vm674 = vmand %vm642, %vm658
    %vm675 = vmand %vm643, %vm659
    %vm676 = vmand %vm644, %vm660
    %vm677 = vmand %vm645, %vm661
    %vm678 = vmand %vm646, %vm662
    %vm679 = vmand %vm647, %vm663
    %vm680 = vmand %vm648, %vm664
    %vm681 = vmand %vm649, %vm665
    %vm682 = vmand %vm650, %vm666
    %vm683 = vmand %vm651, %vm667
    %vm684 = vmand %vm652, %vm668
    %vm685 = vmand %vm653, %vm669
    %vm686 = vmand %vm654, %vm670
    %vm687 = vmand %vm655, %vm671
    %vm688 = vmand %vm656, %vm672
    %vm689 = vcmp.lt.s32.totalorder %v35, 32
    %vm690 = vcmp.ge.s32.totalorder %v35, 32
    %vm691 = vcmp.lt.s32.totalorder %v35, 64
    %vm692 = vmand %vm690, %vm691
    %vm693 = vmand %vm625, %vm689
    %vm694 = vmand %vm626, %vm689
    %vm695 = vmand %vm627, %vm689
    %vm696 = vmand %vm628, %vm689
    %vm697 = vmand %vm629, %vm689
    %vm698 = vmand %vm630, %vm689
    %vm699 = vmand %vm631, %vm689
    %vm700 = vmand %vm632, %vm689
    %vm701 = vmand %vm633, %vm689
    %vm702 = vmand %vm634, %vm689
    %vm703 = vmand %vm635, %vm689
    %vm704 = vmand %vm636, %vm689
    %vm705 = vmand %vm637, %vm689
    %vm706 = vmand %vm638, %vm689
    %vm707 = vmand %vm639, %vm689
    %vm708 = vmand %vm640, %vm689
    %vm709 = vmand %vm673, %vm692
    %vm710 = vmand %vm674, %vm692
    %vm711 = vmand %vm675, %vm692
    %vm712 = vmand %vm676, %vm692
    %vm713 = vmand %vm677, %vm692
    %vm714 = vmand %vm678, %vm692
    %vm715 = vmand %vm679, %vm692
    %vm716 = vmand %vm680, %vm692
    %vm717 = vmand %vm681, %vm692
    %vm718 = vmand %vm682, %vm692
    %vm719 = vmand %vm683, %vm692
    %vm720 = vmand %vm684, %vm692
    %vm721 = vmand %vm685, %vm692
    %vm722 = vmand %vm686, %vm692
    %vm723 = vmand %vm687, %vm692
    %vm724 = vmand %vm688, %vm692
    %vm725 = vmor %vm693, %vm709
    %vm726 = vmor %vm694, %vm710
    %vm727 = vmor %vm695, %vm711
    %vm728 = vmor %vm696, %vm712
    %vm729 = vmor %vm697, %vm713
    %vm730 = vmor %vm698, %vm714
    %vm731 = vmor %vm699, %vm715
    %vm732 = vmor %vm700, %vm716
    %vm733 = vmor %vm701, %vm717
    %vm734 = vmor %vm702, %vm718
    %vm735 = vmor %vm703, %vm719
    %vm736 = vmor %vm704, %vm720
    %vm737 = vmor %vm705, %vm721
    %vm738 = vmor %vm706, %vm722
    %vm739 = vmor %vm707, %vm723
    %vm740 = vmor %vm708, %vm724
    %vm741 = vcmp.ne.s32.totalorder %v609, %v35
    %vm742 = vcmp.ne.s32.totalorder %v610, %v35
    %vm743 = vcmp.ne.s32.totalorder %v611, %v35
    %vm744 = vcmp.ne.s32.totalorder %v612, %v35
    %vm745 = vcmp.ne.s32.totalorder %v613, %v35
    %vm746 = vcmp.ne.s32.totalorder %v614, %v35
    %vm747 = vcmp.ne.s32.totalorder %v615, %v35
    %vm748 = vcmp.ne.s32.totalorder %v616, %v35
    %vm749 = vcmp.ne.s32.totalorder %v617, %v35
    %vm750 = vcmp.ne.s32.totalorder %v618, %v35
    %vm751 = vcmp.ne.s32.totalorder %v619, %v35
    %vm752 = vcmp.ne.s32.totalorder %v620, %v35
    %vm753 = vcmp.ne.s32.totalorder %v621, %v35
    %vm754 = vcmp.ne.s32.totalorder %v622, %v35
    %vm755 = vcmp.ne.s32.totalorder %v623, %v35
    %vm756 = vcmp.ne.s32.totalorder %v624, %v35
    %vm757 = vmand %vm725, %vm741
    %vm758 = vmand %vm726, %vm742
    %vm759 = vmand %vm727, %vm743
    %vm760 = vmand %vm728, %vm744
    %vm761 = vmand %vm729, %vm745
    %vm762 = vmand %vm730, %vm746
    %vm763 = vmand %vm731, %vm747
    %vm764 = vmand %vm732, %vm748
    %vm765 = vmand %vm733, %vm749
    %vm766 = vmand %vm734, %vm750
    %vm767 = vmand %vm735, %vm751
    %vm768 = vmand %vm736, %vm752
    %vm769 = vmand %vm737, %vm753
    %vm770 = vmand %vm738, %vm754
    %vm771 = vmand %vm739, %vm755
    %vm772 = vmand %vm740, %vm756
    %v773 = vsel %vm757, %v530, -1e+30
    %v774 = vsel %vm758, %v535, -1e+30
    %v775 = vsel %vm759, %v540, -1e+30
    %v776 = vsel %vm760, %v545, -1e+30
    %v777 = vsel %vm761, %v550, -1e+30
    %v778 = vsel %vm762, %v555, -1e+30
    %v779 = vsel %vm763, %v560, -1e+30
    %v780 = vsel %vm764, %v565, -1e+30
    %v781 = vsel %vm765, %v570, -1e+30
    %v782 = vsel %vm766, %v575, -1e+30
    %v783 = vsel %vm767, %v580, -1e+30
    %v784 = vsel %vm768, %v585, -1e+30
    %v785 = vsel %vm769, %v590, -1e+30
    %v786 = vsel %vm770, %v595, -1e+30
    %v787 = vsel %vm771, %v600, -1e+30
    %v788 = vsel %vm772, %v605, -1e+30
    %vm789 = vcmp.lt.s32.totalorder %v609, 16
    %vm790 = vcmp.lt.s32.totalorder %v610, 16
    %vm791 = vcmp.lt.s32.totalorder %v611, 16
    %vm792 = vcmp.lt.s32.totalorder %v612, 16
    %vm793 = vcmp.lt.s32.totalorder %v613, 16
    %vm794 = vcmp.lt.s32.totalorder %v614, 16
    %vm795 = vcmp.lt.s32.totalorder %v615, 16
    %vm796 = vcmp.lt.s32.totalorder %v616, 16
    %vm797 = vcmp.lt.s32.totalorder %v617, 16
    %vm798 = vcmp.lt.s32.totalorder %v618, 16
    %vm799 = vcmp.lt.s32.totalorder %v619, 16
    %vm800 = vcmp.lt.s32.totalorder %v620, 16
    %vm801 = vcmp.lt.s32.totalorder %v621, 16
    %vm802 = vcmp.lt.s32.totalorder %v622, 16
    %vm803 = vcmp.lt.s32.totalorder %v623, 16
    %vm804 = vcmp.lt.s32.totalorder %v624, 16
    %v805 = vadd.s32 %v610, 16
    %v806 = vadd.s32 %v611, 16
    %v807 = vadd.s32 %v612, 16
    %v808 = vadd.s32 %v613, 16
    %v809 = vadd.s32 %v614, 16
    %v810 = vadd.s32 %v615, 16
    %v811 = vadd.s32 %v616, 16
    %v812 = vadd.s32 %v617, 16
    %v813 = vadd.s32 %v618, 16
    %v814 = vadd.s32 %v619, 16
    %v815 = vadd.s32 %v620, 16
    %v816 = vadd.s32 %v621, 16
    %v817 = vadd.s32 %v622, 16
    %v818 = vadd.s32 %v623, 16
    %v819 = vadd.s32 %v624, 16
    %v820 = vsub.s32 %v609, 16
    %v821 = vsub.s32 %v610, 16
    %v822 = vsub.s32 %v612, 16
    %v823 = vsub.s32 %v613, 16
    %v824 = vsub.s32 %v614, 16
    %v825 = vsub.s32 %v615, 16
    %v826 = vsub.s32 %v616, 16
    %v827 = vsub.s32 %v617, 16
    %v828 = vsub.s32 %v618, 16
    %v829 = vsub.s32 %v619, 16
    %v830 = vsub.s32 %v620, 16
    %v831 = vsub.s32 %v621, 16
    %v832 = vsub.s32 %v622, 16
    %v833 = vsub.s32 %v623, 16
    %v834 = vsub.s32 %v624, 16
    %vm835 = vcmp.lt.s32.totalorder %v609, 48
    %vm836 = vcmp.lt.s32.totalorder %v610, 48
    %vm837 = vcmp.lt.s32.totalorder %v611, 48
    %vm838 = vcmp.lt.s32.totalorder %v612, 48
    %vm839 = vcmp.lt.s32.totalorder %v613, 48
    %vm840 = vcmp.lt.s32.totalorder %v614, 48
    %vm841 = vcmp.lt.s32.totalorder %v615, 48
    %vm842 = vcmp.lt.s32.totalorder %v616, 48
    %vm843 = vcmp.lt.s32.totalorder %v617, 48
    %vm844 = vcmp.lt.s32.totalorder %v618, 48
    %vm845 = vcmp.lt.s32.totalorder %v619, 48
    %vm846 = vcmp.lt.s32.totalorder %v620, 48
    %vm847 = vcmp.lt.s32.totalorder %v621, 48
    %vm848 = vcmp.lt.s32.totalorder %v622, 48
    %vm849 = vcmp.lt.s32.totalorder %v623, 48
    %vm850 = vcmp.lt.s32.totalorder %v624, 48
    %v851 = vsel %vm657, %v820, %v609
    %v852 = vsel %vm658, %v821, %v610
    %v853 = vsel %vm659, %v609, %v611
    %v854 = vsel %vm660, %v822, %v612
    %v855 = vsel %vm661, %v823, %v613
    %v856 = vsel %vm662, %v824, %v614
    %v857 = vsel %vm663, %v825, %v615
    %v858 = vsel %vm664, %v826, %v616
    %v859 = vsel %vm665, %v827, %v617
    %v860 = vsel %vm666, %v828, %v618
    %v861 = vsel %vm667, %v829, %v619
    %v862 = vsel %vm668, %v830, %v620
    %v863 = vsel %vm669, %v831, %v621
    %v864 = vsel %vm670, %v832, %v622
    %v865 = vsel %vm671, %v833, %v623
    %v866 = vsel %vm672, %v834, %v624
    %v867 = vsel %vm835, %v611, %v851
    %v868 = vsel %vm836, %v805, %v852
    %v869 = vsel %vm837, %v806, %v853
    %v870 = vsel %vm838, %v807, %v854
    %v871 = vsel %vm839, %v808, %v855
    %v872 = vsel %vm840, %v809, %v856
    %v873 = vsel %vm841, %v810, %v857
    %v874 = vsel %vm842, %v811, %v858
    %v875 = vsel %vm843, %v812, %v859
    %v876 = vsel %vm844, %v813, %v860
    %v877 = vsel %vm845, %v814, %v861
    %v878 = vsel %vm846, %v815, %v862
    %v879 = vsel %vm847, %v816, %v863
    %v880 = vsel %vm848, %v817, %v864
    %v881 = vsel %vm849, %v818, %v865
    %v882 = vsel %vm850, %v819, %v866
    %v883 = vsel %vm625, %v820, %v867
    %v884 = vsel %vm626, %v821, %v868
    %v885 = vsel %vm627, %v609, %v869
    %v886 = vsel %vm628, %v822, %v870
    %v887 = vsel %vm629, %v823, %v871
    %v888 = vsel %vm630, %v824, %v872
    %v889 = vsel %vm631, %v825, %v873
    %v890 = vsel %vm632, %v826, %v874
    %v891 = vsel %vm633, %v827, %v875
    %v892 = vsel %vm634, %v828, %v876
    %v893 = vsel %vm635, %v829, %v877
    %v894 = vsel %vm636, %v830, %v878
    %v895 = vsel %vm637, %v831, %v879
    %v896 = vsel %vm638, %v832, %v880
    %v897 = vsel %vm639, %v833, %v881
    %v898 = vsel %vm640, %v834, %v882
    %v899 = vsel %vm789, %v611, %v883
    %v900 = vsel %vm790, %v805, %v884
    %v901 = vsel %vm791, %v806, %v885
    %v902 = vsel %vm792, %v807, %v886
    %v903 = vsel %vm793, %v808, %v887
    %v904 = vsel %vm794, %v809, %v888
    %v905 = vsel %vm795, %v810, %v889
    %v906 = vsel %vm796, %v811, %v890
    %v907 = vsel %vm797, %v812, %v891
    %v908 = vsel %vm798, %v813, %v892
    %v909 = vsel %vm799, %v814, %v893
    %v910 = vsel %vm800, %v815, %v894
    %v911 = vsel %vm801, %v816, %v895
    %v912 = vsel %vm802, %v817, %v896
    %v913 = vsel %vm803, %v818, %v897
    %v914 = vsel %vm804, %v819, %v898
    %vm915 = vcmp.eq.s32.totalorder %v35, %v899
    %vm916 = vcmp.eq.s32.totalorder %v35, %v900
    %vm917 = vcmp.eq.s32.totalorder %v35, %v901
    %vm918 = vcmp.eq.s32.totalorder %v35, %v902
    %vm919 = vcmp.eq.s32.totalorder %v35, %v903
    %vm920 = vcmp.eq.s32.totalorder %v35, %v904
    %vm921 = vcmp.eq.s32.totalorder %v35, %v905
    %vm922 = vcmp.eq.s32.totalorder %v35, %v906
    %vm923 = vcmp.eq.s32.totalorder %v35, %v907
    %vm924 = vcmp.eq.s32.totalorder %v35, %v908
    %vm925 = vcmp.eq.s32.totalorder %v35, %v909
    %vm926 = vcmp.eq.s32.totalorder %v35, %v910
    %vm927 = vcmp.eq.s32.totalorder %v35, %v911
    %vm928 = vcmp.eq.s32.totalorder %v35, %v912
    %vm929 = vcmp.eq.s32.totalorder %v35, %v913
    %vm930 = vcmp.eq.s32.totalorder %v35, %v914
    %v931 = vsel %vm915, %v530, 0.0
    %v932 = vsel %vm916, %v535, 0.0
    %v933 = vsel %vm917, %v540, 0.0
    %v934 = vsel %vm918, %v545, 0.0
    %v935 = vsel %vm919, %v550, 0.0
    %v936 = vsel %vm920, %v555, 0.0
    %v937 = vsel %vm921, %v560, 0.0
    %v938 = vsel %vm922, %v565, 0.0
    %v939 = vsel %vm923, %v570, 0.0
    %v940 = vsel %vm924, %v575, 0.0
    %v941 = vsel %vm925, %v580, 0.0
    %v942 = vsel %vm926, %v585, 0.0
    %v943 = vsel %vm927, %v590, 0.0
    %v944 = vsel %vm928, %v595, 0.0
    %v945 = vsel %vm929, %v600, 0.0
    %v946 = vsel %vm930, %v605, 0.0
    %947 = vadd.xlane.f32.xlu0 %v931
    %v948 = vpop.xlane.xlu0 %947
    %949 = vadd.xlane.f32.xlu0 %v932
    %v950 = vpop.xlane.xlu0 %949
    %951 = vadd.xlane.f32.xlu0 %v933
    %v952 = vpop.xlane.xlu0 %951
    %953 = vadd.xlane.f32.xlu0 %v934
    %v954 = vpop.xlane.xlu0 %953
    %955 = vadd.xlane.f32.xlu0 %v935
    %v956 = vpop.xlane.xlu0 %955
    %957 = vadd.xlane.f32.xlu0 %v936
    %v958 = vpop.xlane.xlu0 %957
    %959 = vadd.xlane.f32.xlu0 %v937
    %v960 = vpop.xlane.xlu0 %959
    %961 = vadd.xlane.f32.xlu0 %v938
    %v962 = vpop.xlane.xlu0 %961
    %963 = vadd.xlane.f32.xlu0 %v939
    %v964 = vpop.xlane.xlu0 %963
    %965 = vadd.xlane.f32.xlu0 %v940
    %v966 = vpop.xlane.xlu0 %965
    %967 = vadd.xlane.f32.xlu0 %v941
    %v968 = vpop.xlane.xlu0 %967
    %969 = vadd.xlane.f32.xlu0 %v942
    %v970 = vpop.xlane.xlu0 %969
    %971 = vadd.xlane.f32.xlu0 %v943
    %v972 = vpop.xlane.xlu0 %971
    %973 = vadd.xlane.f32.xlu0 %v944
    %v974 = vpop.xlane.xlu0 %973
    %975 = vadd.xlane.f32.xlu0 %v945
    %v976 = vpop.xlane.xlu0 %975
    %977 = vadd.xlane.f32.xlu0 %v946
    %v978 = vpop.xlane.xlu0 %977
    %979 = vmax.xlane.f32.xlu0 %v773
    %v980 = vpop.xlane.xlu0 %979
    %981 = vmax.xlane.f32.xlu0 %v774
    %v982 = vpop.xlane.xlu0 %981
    %983 = vmax.xlane.f32.xlu0 %v775
    %v984 = vpop.xlane.xlu0 %983
    %985 = vmax.xlane.f32.xlu0 %v776
    %v986 = vpop.xlane.xlu0 %985
    %987 = vmax.xlane.f32.xlu0 %v777
    %v988 = vpop.xlane.xlu0 %987
    %989 = vmax.xlane.f32.xlu0 %v778
    %v990 = vpop.xlane.xlu0 %989
    %991 = vmax.xlane.f32.xlu0 %v779
    %v992 = vpop.xlane.xlu0 %991
    %993 = vmax.xlane.f32.xlu0 %v780
    %v994 = vpop.xlane.xlu0 %993
    %995 = vmax.xlane.f32.xlu0 %v781
    %v996 = vpop.xlane.xlu0 %995
    %997 = vmax.xlane.f32.xlu0 %v782
    %v998 = vpop.xlane.xlu0 %997
    %999 = vmax.xlane.f32.xlu0 %v783
    %v1000 = vpop.xlane.xlu0 %999
    %1001 = vmax.xlane.f32.xlu0 %v784
    %v1002 = vpop.xlane.xlu0 %1001
    %1003 = vmax.xlane.f32.xlu0 %v785
    %v1004 = vpop.xlane.xlu0 %1003
    %1005 = vmax.xlane.f32.xlu0 %v786
    %v1006 = vpop.xlane.xlu0 %1005
    %1007 = vmax.xlane.f32.xlu0 %v787
    %v1008 = vpop.xlane.xlu0 %1007
    %1009 = vmax.xlane.f32.xlu0 %v788
    %v1010 = vpop.xlane.xlu0 %1009
    %v1011 = vsub.f32 %v773, %v980
    %v1012 = vsub.f32 %v774, %v982
    %v1013 = vsub.f32 %v775, %v984
    %v1014 = vsub.f32 %v776, %v986
    %v1015 = vsub.f32 %v777, %v988
    %v1016 = vsub.f32 %v778, %v990
    %v1017 = vsub.f32 %v779, %v992
    %v1018 = vsub.f32 %v780, %v994
    %v1019 = vsub.f32 %v781, %v996
    %v1020 = vsub.f32 %v782, %v998
    %v1021 = vsub.f32 %v783, %v1000
    %v1022 = vsub.f32 %v784, %v1002
    %v1023 = vsub.f32 %v785, %v1004
    %v1024 = vsub.f32 %v786, %v1006
    %v1025 = vsub.f32 %v787, %v1008
    %v1026 = vsub.f32 %v788, %v1010
    %v1027 = vmul.f32 %v1011, 1.442695
    %v1028 = vpow.pop %v1027
    %v1029 = vmul.f32 %v1012, 1.442695
    %v1030 = vpow.pop %v1029
    %v1031 = vmul.f32 %v1013, 1.442695
    %v1032 = vpow.pop %v1031
    %v1033 = vmul.f32 %v1014, 1.442695
    %v1034 = vpow.pop %v1033
    %v1035 = vmul.f32 %v1015, 1.442695
    %v1036 = vpow.pop %v1035
    %v1037 = vmul.f32 %v1016, 1.442695
    %v1038 = vpow.pop %v1037
    %v1039 = vmul.f32 %v1017, 1.442695
    %v1040 = vpow.pop %v1039
    %v1041 = vmul.f32 %v1018, 1.442695
    %v1042 = vpow.pop %v1041
    %v1043 = vmul.f32 %v1019, 1.442695
    %v1044 = vpow.pop %v1043
    %v1045 = vmul.f32 %v1020, 1.442695
    %v1046 = vpow.pop %v1045
    %v1047 = vmul.f32 %v1021, 1.442695
    %v1048 = vpow.pop %v1047
    %v1049 = vmul.f32 %v1022, 1.442695
    %v1050 = vpow.pop %v1049
    %v1051 = vmul.f32 %v1023, 1.442695
    %v1052 = vpow.pop %v1051
    %v1053 = vmul.f32 %v1024, 1.442695
    %v1054 = vpow.pop %v1053
    %v1055 = vmul.f32 %v1025, 1.442695
    %v1056 = vpow.pop %v1055
    %v1057 = vmul.f32 %v1026, 1.442695
    %v1058 = vpow.pop %v1057
    %1059 = vadd.xlane.f32.xlu0 %v1028
    %v1060 = vpop.xlane.xlu0 %1059
    %1061 = vadd.xlane.f32.xlu0 %v1030
    %v1062 = vpop.xlane.xlu0 %1061
    %1063 = vadd.xlane.f32.xlu0 %v1032
    %v1064 = vpop.xlane.xlu0 %1063
    %1065 = vadd.xlane.f32.xlu0 %v1034
    %v1066 = vpop.xlane.xlu0 %1065
    %1067 = vadd.xlane.f32.xlu0 %v1036
    %v1068 = vpop.xlane.xlu0 %1067
    %1069 = vadd.xlane.f32.xlu0 %v1038
    %v1070 = vpop.xlane.xlu0 %1069
    %1071 = vadd.xlane.f32.xlu0 %v1040
    %v1072 = vpop.xlane.xlu0 %1071
    %1073 = vadd.xlane.f32.xlu0 %v1042
    %v1074 = vpop.xlane.xlu0 %1073
    %1075 = vadd.xlane.f32.xlu0 %v1044
    %v1076 = vpop.xlane.xlu0 %1075
    %1077 = vadd.xlane.f32.xlu0 %v1046
    %v1078 = vpop.xlane.xlu0 %1077
    %1079 = vadd.xlane.f32.xlu0 %v1048
    %v1080 = vpop.xlane.xlu0 %1079
    %1081 = vadd.xlane.f32.xlu0 %v1050
    %v1082 = vpop.xlane.xlu0 %1081
    %1083 = vadd.xlane.f32.xlu0 %v1052
    %v1084 = vpop.xlane.xlu0 %1083
    %1085 = vadd.xlane.f32.xlu0 %v1054
    %v1086 = vpop.xlane.xlu0 %1085
    %1087 = vadd.xlane.f32.xlu0 %v1056
    %v1088 = vpop.xlane.xlu0 %1087
    %1089 = vadd.xlane.f32.xlu0 %v1058
    %v1090 = vpop.xlane.xlu0 %1089
    %v1091 = vlog2.pop %v1060
    %v1092 = vmul.f32 %v1091, 0.6931472
    %v1093 = vlog2.pop %v1062
    %v1094 = vmul.f32 %v1093, 0.6931472
    %v1095 = vlog2.pop %v1064
    %v1096 = vmul.f32 %v1095, 0.6931472
    %v1097 = vlog2.pop %v1066
    %v1098 = vmul.f32 %v1097, 0.6931472
    %v1099 = vlog2.pop %v1068
    %v1100 = vmul.f32 %v1099, 0.6931472
    %v1101 = vlog2.pop %v1070
    %v1102 = vmul.f32 %v1101, 0.6931472
    %v1103 = vlog2.pop %v1072
    %v1104 = vmul.f32 %v1103, 0.6931472
    %v1105 = vlog2.pop %v1074
    %v1106 = vmul.f32 %v1105, 0.6931472
    %v1107 = vlog2.pop %v1076
    %v1108 = vmul.f32 %v1107, 0.6931472
    %v1109 = vlog2.pop %v1078
    %v1110 = vmul.f32 %v1109, 0.6931472
    %v1111 = vlog2.pop %v1080
    %v1112 = vmul.f32 %v1111, 0.6931472
    %v1113 = vlog2.pop %v1082
    %v1114 = vmul.f32 %v1113, 0.6931472
    %v1115 = vlog2.pop %v1084
    %v1116 = vmul.f32 %v1115, 0.6931472
    %v1117 = vlog2.pop %v1086
    %v1118 = vmul.f32 %v1117, 0.6931472
    %v1119 = vlog2.pop %v1088
    %v1120 = vmul.f32 %v1119, 0.6931472
    %v1121 = vlog2.pop %v1090
    %v1122 = vmul.f32 %v1121, 0.6931472
    %v1123 = vadd.f32 %v1092, %v980
    %v1124 = vadd.f32 %v1094, %v982
    %v1125 = vadd.f32 %v1096, %v984
    %v1126 = vadd.f32 %v1098, %v986
    %v1127 = vadd.f32 %v1100, %v988
    %v1128 = vadd.f32 %v1102, %v990
    %v1129 = vadd.f32 %v1104, %v992
    %v1130 = vadd.f32 %v1106, %v994
    %v1131 = vadd.f32 %v1108, %v996
    %v1132 = vadd.f32 %v1110, %v998
    %v1133 = vadd.f32 %v1112, %v1000
    %v1134 = vadd.f32 %v1114, %v1002
    %v1135 = vadd.f32 %v1116, %v1004
    %v1136 = vadd.f32 %v1118, %v1006
    %v1137 = vadd.f32 %v1120, %v1008
    %v1138 = vadd.f32 %v1122, %v1010
    %v1139 = vsel %vm657, 0.03125, 0.0
    %v1140 = vsel %vm658, 0.03125, 0.0
    %v1141 = vsel %vm659, 0.03125, 0.0
    %v1142 = vsel %vm660, 0.03125, 0.0
    %v1143 = vsel %vm661, 0.03125, 0.0
    %v1144 = vsel %vm662, 0.03125, 0.0
    %v1145 = vsel %vm663, 0.03125, 0.0
    %v1146 = vsel %vm664, 0.03125, 0.0
    %v1147 = vsel %vm665, 0.03125, 0.0
    %v1148 = vsel %vm666, 0.03125, 0.0
    %v1149 = vsel %vm667, 0.03125, 0.0
    %v1150 = vsel %vm668, 0.03125, 0.0
    %v1151 = vsel %vm669, 0.03125, 0.0
    %v1152 = vsel %vm670, 0.03125, 0.0
    %v1153 = vsel %vm671, 0.03125, 0.0
    %v1154 = vsel %vm672, 0.03125, 0.0
    %v1155 = vsel %vm625, 0.03125, %v1139
    %v1156 = vsel %vm626, 0.03125, %v1140
    %v1157 = vsel %vm627, 0.03125, %v1141
    %v1158 = vsel %vm628, 0.03125, %v1142
    %v1159 = vsel %vm629, 0.03125, %v1143
    %v1160 = vsel %vm630, 0.03125, %v1144
    %v1161 = vsel %vm631, 0.03125, %v1145
    %v1162 = vsel %vm632, 0.03125, %v1146
    %v1163 = vsel %vm633, 0.03125, %v1147
    %v1164 = vsel %vm634, 0.03125, %v1148
    %v1165 = vsel %vm635, 0.03125, %v1149
    %v1166 = vsel %vm636, 0.03125, %v1150
    %v1167 = vsel %vm637, 0.03125, %v1151
    %v1168 = vsel %vm638, 0.03125, %v1152
    %v1169 = vsel %vm639, 0.03125, %v1153
    %v1170 = vsel %vm640, 0.03125, %v1154
    %v1171 = vsub.f32 %v1123, %v948
    %v1172 = vsub.f32 %v1124, %v950
    %v1173 = vsub.f32 %v1125, %v952
    %v1174 = vsub.f32 %v1126, %v954
    %v1175 = vsub.f32 %v1127, %v956
    %v1176 = vsub.f32 %v1128, %v958
    %v1177 = vsub.f32 %v1129, %v960
    %v1178 = vsub.f32 %v1130, %v962
    %v1179 = vsub.f32 %v1131, %v964
    %v1180 = vsub.f32 %v1132, %v966
    %v1181 = vsub.f32 %v1133, %v968
    %v1182 = vsub.f32 %v1134, %v970
    %v1183 = vsub.f32 %v1135, %v972
    %v1184 = vsub.f32 %v1136, %v974
    %v1185 = vsub.f32 %v1137, %v976
    %v1186 = vsub.f32 %v1138, %v978
    %v1187 = vmul.f32 %v1155, %v1171
    %v1188 = vmul.f32 %v1156, %v1172
    %v1189 = vmul.f32 %v1157, %v1173
    %v1190 = vmul.f32 %v1158, %v1174
    %v1191 = vmul.f32 %v1159, %v1175
    %v1192 = vmul.f32 %v1160, %v1176
    %v1193 = vmul.f32 %v1161, %v1177
    %v1194 = vmul.f32 %v1162, %v1178
    %v1195 = vmul.f32 %v1163, %v1179
    %v1196 = vmul.f32 %v1164, %v1180
    %v1197 = vmul.f32 %v1165, %v1181
    %v1198 = vmul.f32 %v1166, %v1182
    %v1199 = vmul.f32 %v1167, %v1183
    %v1200 = vmul.f32 %v1168, %v1184
    %v1201 = vmul.f32 %v1169, %v1185
    %v1202 = vmul.f32 %v1170, %v1186
    %vm1203 = vcmask 7168
    %v1204 = vsel %vm1203, %v1187, 0.0
    %v1205 = vsel %vm1203, %v1188, 0.0
    %v1206 = vadd.f32 %v1204, %v1205
    %v1207 = vsel %vm1203, %v1189, 0.0
    %v1208 = vadd.f32 %v1206, %v1207
    %v1209 = vsel %vm1203, %v1190, 0.0
    %v1210 = vadd.f32 %v1208, %v1209
    %v1211 = vsel %vm1203, %v1191, 0.0
    %v1212 = vadd.f32 %v1210, %v1211
    %v1213 = vsel %vm1203, %v1192, 0.0
    %v1214 = vadd.f32 %v1212, %v1213
    %v1215 = vsel %vm1203, %v1193, 0.0
    %v1216 = vadd.f32 %v1214, %v1215
    %v1217 = vsel %vm1203, %v1194, 0.0
    %v1218 = vadd.f32 %v1216, %v1217
    %v1219 = vsel %vm1203, %v1195, 0.0
    %v1220 = vadd.f32 %v1218, %v1219
    %v1221 = vsel %vm1203, %v1196, 0.0
    %v1222 = vadd.f32 %v1220, %v1221
    %v1223 = vsel %vm1203, %v1197, 0.0
    %v1224 = vadd.f32 %v1222, %v1223
    %v1225 = vsel %vm1203, %v1198, 0.0
    %v1226 = vadd.f32 %v1224, %v1225
    %v1227 = vsel %vm1203, %v1199, 0.0
    %v1228 = vadd.f32 %v1226, %v1227
    %v1229 = vsel %vm1203, %v1200, 0.0
    %v1230 = vadd.f32 %v1228, %v1229
    %v1231 = vsel %vm1203, %v1201, 0.0
    %v1232 = vadd.f32 %v1230, %v1231
    %v1233 = vsel %vm1203, %v1202, 0.0
    %v1234 = vadd.f32 %v1232, %v1233
    %1235 = vadd.xlane.f32.xlu0 %v1234
    %v1236 = vpop.xlane.xlu0 %1235
    %v1237 = vrot.slane %v1236, 4
    %v1238 = vadd.f32 %v1236, %v1237
    %v1239 = vrot.slane %v1238, 2
    %v1240 = vadd.f32 %v1238, %v1239
    %v1241 = vrot.slane %v1240, 1
    %v1242 = vadd.f32 %v1240, %v1241
    %s1243 = vtos %v1242
    %s1244 = scalar_lea.smem [#allocation2], 0
    %1245 = sst [smem:[%s1244]] %s1243
    // Predicated region
    $region26: #{global_ssl_forward.1} parent=1 // pred_check
      _
    $region27: #{global_ssl_forward.1} parent=1 // pred_check_branch
      %1247 = sbr.rel (0) target = $region29
    $region28: #{global_ssl_forward.1} parent=1 // pred_region
      %s1249 = ssub.s32 16, 16
      %1250 = vsyncadd [#allocation3], %s1249
      %1253 = dma.smem_to_hbm [#allocation2], 16, %s6, [#allocation3]
    $region29: #{global_ssl_forward.1} parent=1 // pred_fallthru
      _
    // Predicated region
    $region30: #{global_ssl_forward.1} parent=1 // pred_check
      _
    $region31: #{global_ssl_forward.1} parent=1 // pred_check_branch
      %1255 = sbr.rel (0) target = $region33
    $region32: #{global_ssl_forward.1} parent=1 // pred_region
      %1256 = dma.done [#allocation3], 16
    $region33: #{global_ssl_forward.1} parent=1 // pred_fallthru
      _
    %1257 = sfence
    %1258 = vsyncpa [#allocation3], 1

</llo_original>
